<compile_context>
chip_gen: v6e
topology: v6e:2x2x1
jax: 0.10.0
libtpu: 0.0.40
codegen_flags: <defaults>
</compile_context>

<pallas_src>
import functools

import jax
import jax.numpy as jnp
from jax.experimental import pallas as pl
from jax.experimental.pallas import tpu as pltpu

LANE = 128     # vreg lane width
SUBLANE = 8    # vreg sublane count (f32)


def _round_up(x, m):
    return ((x + m - 1) // m) * m


# ----------------------------------------------------------------------------
# Fused Pallas kernel: n_layers tanh-RNN + FC epilogue, single invocation.
# ----------------------------------------------------------------------------
def _make_fused_rnn_fc_kernel(n_layers):
    """Builds the fused kernel for a fixed (static) layer count.

    Ref order (inputs, outputs, scratch):
      x_ref                 (T, Bp, Pin0)  time-major, zero-padded input
      w_ih[l] l=0..L-1      (Pin_l, Ph)    W_ih^T, zero-padded
      w_hh[l] l=0..L-1      (Ph, Ph)       W_hh^T, zero-padded
      b[l]    l=0..L-1      (1, Ph)        b_ih + b_hh, zero-padded
      w_fc                  (Ph, Op)       FC weight^T, zero-padded
      b_fc                  (1, Op)        FC bias, zero-padded
      y_ref                 (Bp, Op)       output = h_T(top) @ W_fc + b_fc
      pre_scr  VMEM         (T, Bp, Ph)    bulk input projections (+bias)
      seq_scr  VMEM         (T, Bp, Ph)    current layer's hidden sequence
    """

    def kernel(*refs):
        L = n_layers
        x_ref = refs[0]
        w_ih = refs[1:1 + L]
        w_hh = refs[1 + L:1 + 2 * L]
        b = refs[1 + 2 * L:1 + 3 * L]
        w_fc_ref = refs[1 + 3 * L]
        b_fc_ref = refs[2 + 3 * L]
        y_ref = refs[3 + 3 * L]
        pre_scr = refs[4 + 3 * L]
        seq_scr = refs[5 + 3 * L]

        T, Bp, _ = x_ref.shape
        Ph = w_hh[0].shape[0]

        cur = x_ref          # current layer's input sequence ref: (T, Bp, Pin_l)
        h = None
        for l in range(L):                      # static unroll over layers
            last = (l == L - 1)
            pin = cur.shape[2]

            # -- Bulk input projection for ALL T steps at once, bias folded in --
            #    (T*Bp, Pin) @ (Pin, Ph): 8x better MXU row utilization than the
            #    per-step path and W_ih pushed once per layer instead of T times.
            x2d = cur[...].reshape(T * Bp, pin)
            pre = (jnp.dot(x2d, w_ih[l][...],
                           preferred_element_type=jnp.float32)
                   + b[l][...])
            pre_scr[...] = pre.reshape(T, Bp, Ph)

            # -- Serial recurrence: h_t = tanh(pre[t] + h_{t-1} @ W_hh^T) --
            # W_hh loaded ONCE per layer; the same value is the RHS of every
            # unrolled step (keeps the recurrent weight staged in the MXU).
            w_hh_l = w_hh[l][...]
            h = jnp.tanh(pre_scr[0])            # h_{-1} == 0 (PyTorch default)
            if not last:
                seq_scr[0] = h
            for t in range(1, T):               # static unroll over time
                h = jnp.tanh(
                    pre_scr[t]
                    + jnp.dot(h, w_hh_l, preferred_element_type=jnp.float32))
                if not last:
                    seq_scr[t] = h              # next layer's input at time t
            cur = seq_scr

        # -- FC epilogue on the top layer's last hidden state (lane-dense) --
        y_ref[...] = (jnp.dot(h, w_fc_ref[...],
                              preferred_element_type=jnp.float32)
                      + b_fc_ref[...]).astype(y_ref.dtype)

    return kernel


# ----------------------------------------------------------------------------
# Parameter init (PyTorch default U(-1/sqrt(H), 1/sqrt(H))) and packing.
# ----------------------------------------------------------------------------
def init_params(key, input_size, hidden_dim, output_size, n_layers):
    k = 1.0 / (hidden_dim ** 0.5)
    layers = []
    for layer in range(n_layers):
        in_sz = input_size if layer == 0 else hidden_dim
        key, k1, k2, k3, k4 = jax.random.split(key, 5)
        layers.append(dict(
            w_ih=jax.random.uniform(k1, (hidden_dim, in_sz), jnp.float32, -k, k),
            w_hh=jax.random.uniform(k2, (hidden_dim, hidden_dim), jnp.float32, -k, k),
            b_ih=jax.random.uniform(k3, (hidden_dim,), jnp.float32, -k, k),
            b_hh=jax.random.uniform(k4, (hidden_dim,), jnp.float32, -k, k),
        ))
    key, k5, k6 = jax.random.split(key, 3)
    fc_w = jax.random.uniform(k5, (output_size, hidden_dim), jnp.float32, -k, k)
    fc_b = jax.random.uniform(k6, (output_size,), jnp.float32, -k, k)
    return {"layers": layers, "fc_w": fc_w, "fc_b": fc_b}


def pack_params(params, input_size, hidden_dim, output_size):
    """Zero-pad weights into the lane-dense per-layer layout the kernel expects.

    Padding widths are decoupled: layer-0 input -> Pin0, hidden -> Ph, FC -> Op.
    Zero padding is self-consistent (padded weight rows/cols and bias lanes are 0,
    so padded hidden lanes stay exactly 0 for real batch rows).
    """
    n_layers = len(params["layers"])
    Pin0 = _round_up(input_size, LANE)
    Ph = _round_up(hidden_dim, LANE)
    Op = _round_up(output_size, LANE)

    w_ih_list, w_hh_list, b_list = [], [], []
    for l, lp in enumerate(params["layers"]):
        in_sz = lp["w_ih"].shape[1]
        pin = Pin0 if l == 0 else Ph
        w_ih = jnp.zeros((pin, Ph), jnp.float32).at[:in_sz, :hidden_dim].set(lp["w_ih"].T)
        w_hh = jnp.zeros((Ph, Ph), jnp.float32).at[:hidden_dim, :hidden_dim].set(lp["w_hh"].T)
        bb = jnp.zeros((1, Ph), jnp.float32).at[0, :hidden_dim].set(lp["b_ih"] + lp["b_hh"])
        w_ih_list.append(w_ih)
        w_hh_list.append(w_hh)
        b_list.append(bb)

    w_fc = jnp.zeros((Ph, Op), jnp.float32).at[:hidden_dim, :output_size].set(params["fc_w"].T)
    b_fc = jnp.zeros((1, Op), jnp.float32).at[0, :output_size].set(params["fc_b"])
    return {"w_ih": w_ih_list, "w_hh": w_hh_list, "b": b_list,
            "w_fc": w_fc, "b_fc": b_fc}


# ----------------------------------------------------------------------------
# Forward wrapper
# ----------------------------------------------------------------------------
@functools.partial(jax.jit, static_argnames=("output_size",))
def rnn_model_forward(packed, x_bti, output_size):
    """Forward of RNN_model (tanh RNN, num_directions=1, batch_first=True).

    x_bti: (B, T, I) float32  ->  returns (B, output_size).
    """
    B, T, I = x_bti.shape
    n_layers = len(packed["w_hh"])
    Pin0 = packed["w_ih"][0].shape[0]
    Ph = packed["w_hh"][0].shape[0]
    Op = packed["w_fc"].shape[1]
    B_pad = _round_up(B, SUBLANE)

    # Single fused expression: time-major transpose + zero-pad batch (sublanes)
    # and feature (lanes). XLA fuses zeros + transpose + update into one fusion.
    # Padded LANES must be zero (they sit on the contraction axis of the bulk
    # matmul); padded batch ROWS are harmless (row-independent math).
    x_tm = jnp.zeros((T, B_pad, Pin0), jnp.float32).at[:, :B, :I].set(
        jnp.transpose(x_bti.astype(jnp.float32), (1, 0, 2)))

    kernel = _make_fused_rnn_fc_kernel(n_layers)
    n_in = 3 * n_layers + 3

    y_pad = pl.pallas_call(
        kernel,
        out_shape=jax.ShapeDtypeStruct((B_pad, Op), jnp.float32),
        # Gridless: whole sequence + weights resident in VMEM (a few hundred KiB).
        in_specs=[pl.BlockSpec(memory_space=pltpu.MemorySpace.VMEM)] * n_in,
        out_specs=pl.BlockSpec(memory_space=pltpu.MemorySpace.VMEM),
        scratch_shapes=[
            pltpu.VMEM((T, B_pad, Ph), jnp.float32),   # pre_scr: bulk projections
            pltpu.VMEM((T, B_pad, Ph), jnp.float32),   # seq_scr: layer hidden seq
        ],
        # Explicit VMEM budget (fits all generations; v7x scoped default is
        # 32 MiB of its 64 MiB VMEM). If T*Bp*Ph ever scales past ~12-16 MiB per
        # buffer, switch the sequence buffers to bf16 or chunk T with a grid axis.
        compiler_params=pltpu.CompilerParams(vmem_limit_bytes=32 * 1024 * 1024),
    )(x_tm, *packed["w_ih"], *packed["w_hh"], *packed["b"],
      packed["w_fc"], packed["b_fc"])

    return y_pad[:B, :output_size]


# ----------------------------------------------------------------------------
# Pure-JAX reference (lax.scan) for correctness checking.
# ----------------------------------------------------------------------------
def rnn_model_reference(params, x_bti):
    h_seq = jnp.transpose(x_bti, (1, 0, 2))
    for lp in params["layers"]:
        B = h_seq.shape[1]
        H = lp["w_hh"].shape[0]
        w_ih_t, w_hh_t = lp["w_ih"].T, lp["w_hh"].T
        b = (lp["b_ih"] + lp["b_hh"])[None, :]

        def step(h_prev, x_t, w_ih_t=w_ih_t, w_hh_t=w_hh_t, b=b):
            h_new = jnp.tanh(x_t @ w_ih_t + h_prev @ w_hh_t + b)
            return h_new, h_new

        _, h_seq = jax.lax.scan(step, jnp.zeros((B, H), jnp.float32), h_seq)
    r_out_last = h_seq[-1]                                  # (B, H)
    return r_out_last @ params["fc_w"].T + params["fc_b"][None, :]


# ----------------------------------------------------------------------------
# Main
# ----------------------------------------------------------------------------
if __name__ == "__main__":
    # Model hyperparameters (mirror RNN_model.__init__ args).
    input_size = 16
    output_size = 4
    n_hidden = 32
    n_layers = 2
    batch = 4
    seq = 8

    key = jax.random.PRNGKey(0)
    key, pkey, xkey = jax.random.split(key, 3)

    params = init_params(pkey, input_size, n_hidden, output_size, n_layers)
    packed = pack_params(params, input_size, n_hidden, output_size)
    x = jax.random.normal(xkey, (batch, seq, input_size), dtype=jnp.float32)

    y = rnn_model_forward(packed, x, output_size)
    y = jax.block_until_ready(y)

    y_ref = rnn_model_reference(params, x)
    assert y.shape == (batch, output_size)
    assert jnp.allclose(y, y_ref, atol=1e-5, rtol=1e-4), "mismatch vs reference"

    print("KERNEL_OK")
</pallas_src>

<mosaic_0001>
module attributes {stable_mosaic.version = 11 : i64} {
  func.func @kernel(%arg0: memref<8x8x128xf32, #tpu.memory_space<vmem>>, %arg1: memref<128x128xf32, #tpu.memory_space<vmem>>, %arg2: memref<128x128xf32, #tpu.memory_space<vmem>>, %arg3: memref<128x128xf32, #tpu.memory_space<vmem>>, %arg4: memref<128x128xf32, #tpu.memory_space<vmem>>, %arg5: memref<1x128xf32, #tpu.memory_space<vmem>>, %arg6: memref<1x128xf32, #tpu.memory_space<vmem>>, %arg7: memref<128x128xf32, #tpu.memory_space<vmem>>, %arg8: memref<1x128xf32, #tpu.memory_space<vmem>>, %arg9: memref<8x128xf32, #tpu.memory_space<vmem>>, %arg10: memref<8x8x128xf32, #tpu.memory_space<vmem>>, %arg11: memref<8x8x128xf32, #tpu.memory_space<vmem>>) attributes {dimension_semantics = [], scalar_prefetch = 0 : i64, scratch_operands = 2 : i64, tpu.core_type = #tpu.core_type<tc>} {
    %c0 = arith.constant 0 : index
    %c0_0 = arith.constant 0 : index
    %c0_1 = arith.constant 0 : index
    %0 = vector.load %arg0[%c0, %c0_0, %c0_1] : memref<8x8x128xf32, #tpu.memory_space<vmem>>, vector<8x8x128xf32>
    %1 = vector.shape_cast %0 : vector<8x8x128xf32> to vector<64x128xf32>
    %c0_2 = arith.constant 0 : index
    %c0_3 = arith.constant 0 : index
    %2 = vector.load %arg1[%c0_2, %c0_3] : memref<128x128xf32, #tpu.memory_space<vmem>>, vector<128x128xf32>
    %cst = arith.constant dense<0.000000e+00> : vector<64x128xf32>
    %3 = tpu.matmul %1, %2, %cst {dimension_numbers = #tpu.dot_dimension_numbers<[1], [0], [0], [1], [0, 0, 1, 1], [], []>} : vector<64x128xf32>, vector<128x128xf32>, vector<64x128xf32> -> vector<64x128xf32>
    %c0_4 = arith.constant 0 : index
    %c0_5 = arith.constant 0 : index
    %4 = vector.load %arg5[%c0_4, %c0_5] : memref<1x128xf32, #tpu.memory_space<vmem>>, vector<1x128xf32>
    %5 = vector.broadcast %4 : vector<1x128xf32> to vector<64x128xf32>
    %6 = arith.addf %3, %5 : vector<64x128xf32>
    %7 = vector.shape_cast %6 : vector<64x128xf32> to vector<8x8x128xf32>
    %c0_6 = arith.constant 0 : index
    %c0_7 = arith.constant 0 : index
    %c0_8 = arith.constant 0 : index
    %8 = vector.load %arg10[%c0_6, %c0_7, %c0_8] : memref<8x8x128xf32, #tpu.memory_space<vmem>>, vector<8x8x128xf32>
    tpu.vector_store %arg10[%c0_6, %c0_7, %c0_8], %7 {strides = array<i32>} : memref<8x8x128xf32, #tpu.memory_space<vmem>>, vector<8x8x128xf32>,
    %c0_9 = arith.constant 0 : index
    %c0_10 = arith.constant 0 : index
    %9 = vector.load %arg3[%c0_9, %c0_10] : memref<128x128xf32, #tpu.memory_space<vmem>>, vector<128x128xf32>
    %c0_11 = arith.constant 0 : index
    %c0_12 = arith.constant 0 : index
    %c0_13 = arith.constant 0 : index
    %10 = vector.load %arg10[%c0_11, %c0_12, %c0_13] : memref<8x8x128xf32, #tpu.memory_space<vmem>>, vector<1x8x128xf32>
    %11 = vector.shape_cast %10 : vector<1x8x128xf32> to vector<8x128xf32>
    %12 = math.tanh %11 : vector<8x128xf32>
    %c0_14 = arith.constant 0 : index
    %c0_15 = arith.constant 0 : index
    %c0_16 = arith.constant 0 : index
    %13 = vector.load %arg11[%c0_14, %c0_15, %c0_16] : memref<8x8x128xf32, #tpu.memory_space<vmem>>, vector<1x8x128xf32>
    %14 = vector.shape_cast %13 : vector<1x8x128xf32> to vector<8x128xf32>
    %15 = vector.shape_cast %12 : vector<8x128xf32> to vector<1x8x128xf32>
    tpu.vector_store %arg11[%c0_14, %c0_15, %c0_16], %15 {strides = array<i32>} : memref<8x8x128xf32, #tpu.memory_space<vmem>>, vector<1x8x128xf32>,
    %c1 = arith.constant 1 : index
    %c0_17 = arith.constant 0 : index
    %c0_18 = arith.constant 0 : index
    %16 = vector.load %arg10[%c1, %c0_17, %c0_18] : memref<8x8x128xf32, #tpu.memory_space<vmem>>, vector<1x8x128xf32>
    %17 = vector.shape_cast %16 : vector<1x8x128xf32> to vector<8x128xf32>
    %cst_19 = arith.constant dense<0.000000e+00> : vector<8x128xf32>
    %18 = tpu.matmul %12, %9, %cst_19 {dimension_numbers = #tpu.dot_dimension_numbers<[1], [0], [0], [1], [0, 0, 1, 1], [], []>} : vector<8x128xf32>, vector<128x128xf32>, vector<8x128xf32> -> vector<8x128xf32>
    %19 = arith.addf %17, %18 : vector<8x128xf32>
    %20 = math.tanh %19 : vector<8x128xf32>
    %c1_20 = arith.constant 1 : index
    %c0_21 = arith.constant 0 : index
    %c0_22 = arith.constant 0 : index
    %21 = vector.load %arg11[%c1_20, %c0_21, %c0_22] : memref<8x8x128xf32, #tpu.memory_space<vmem>>, vector<1x8x128xf32>
    %22 = vector.shape_cast %21 : vector<1x8x128xf32> to vector<8x128xf32>
    %23 = vector.shape_cast %20 : vector<8x128xf32> to vector<1x8x128xf32>
    tpu.vector_store %arg11[%c1_20, %c0_21, %c0_22], %23 {strides = array<i32>} : memref<8x8x128xf32, #tpu.memory_space<vmem>>, vector<1x8x128xf32>,
    %c2 = arith.constant 2 : index
    %c0_23 = arith.constant 0 : index
    %c0_24 = arith.constant 0 : index
    %24 = vector.load %arg10[%c2, %c0_23, %c0_24] : memref<8x8x128xf32, #tpu.memory_space<vmem>>, vector<1x8x128xf32>
    %25 = vector.shape_cast %24 : vector<1x8x128xf32> to vector<8x128xf32>
    %cst_25 = arith.constant dense<0.000000e+00> : vector<8x128xf32>
    %26 = tpu.matmul %20, %9, %cst_25 {dimension_numbers = #tpu.dot_dimension_numbers<[1], [0], [0], [1], [0, 0, 1, 1], [], []>} : vector<8x128xf32>, vector<128x128xf32>, vector<8x128xf32> -> vector<8x128xf32>
    %27 = arith.addf %25, %26 : vector<8x128xf32>
    %28 = math.tanh %27 : vector<8x128xf32>
    %c2_26 = arith.constant 2 : index
    %c0_27 = arith.constant 0 : index
    %c0_28 = arith.constant 0 : index
    %29 = vector.load %arg11[%c2_26, %c0_27, %c0_28] : memref<8x8x128xf32, #tpu.memory_space<vmem>>, vector<1x8x128xf32>
    %30 = vector.shape_cast %29 : vector<1x8x128xf32> to vector<8x128xf32>
    %31 = vector.shape_cast %28 : vector<8x128xf32> to vector<1x8x128xf32>
    tpu.vector_store %arg11[%c2_26, %c0_27, %c0_28], %31 {strides = array<i32>} : memref<8x8x128xf32, #tpu.memory_space<vmem>>, vector<1x8x128xf32>,
    %c3 = arith.constant 3 : index
    %c0_29 = arith.constant 0 : index
    %c0_30 = arith.constant 0 : index
    %32 = vector.load %arg10[%c3, %c0_29, %c0_30] : memref<8x8x128xf32, #tpu.memory_space<vmem>>, vector<1x8x128xf32>
    %33 = vector.shape_cast %32 : vector<1x8x128xf32> to vector<8x128xf32>
    %cst_31 = arith.constant dense<0.000000e+00> : vector<8x128xf32>
    %34 = tpu.matmul %28, %9, %cst_31 {dimension_numbers = #tpu.dot_dimension_numbers<[1], [0], [0], [1], [0, 0, 1, 1], [], []>} : vector<8x128xf32>, vector<128x128xf32>, vector<8x128xf32> -> vector<8x128xf32>
    %35 = arith.addf %33, %34 : vector<8x128xf32>
    %36 = math.tanh %35 : vector<8x128xf32>
    %c3_32 = arith.constant 3 : index
    %c0_33 = arith.constant 0 : index
    %c0_34 = arith.constant 0 : index
    %37 = vector.load %arg11[%c3_32, %c0_33, %c0_34] : memref<8x8x128xf32, #tpu.memory_space<vmem>>, vector<1x8x128xf32>
    %38 = vector.shape_cast %37 : vector<1x8x128xf32> to vector<8x128xf32>
    %39 = vector.shape_cast %36 : vector<8x128xf32> to vector<1x8x128xf32>
    tpu.vector_store %arg11[%c3_32, %c0_33, %c0_34], %39 {strides = array<i32>} : memref<8x8x128xf32, #tpu.memory_space<vmem>>, vector<1x8x128xf32>,
    %c4 = arith.constant 4 : index
    %c0_35 = arith.constant 0 : index
    %c0_36 = arith.constant 0 : index
    %40 = vector.load %arg10[%c4, %c0_35, %c0_36] : memref<8x8x128xf32, #tpu.memory_space<vmem>>, vector<1x8x128xf32>
    %41 = vector.shape_cast %40 : vector<1x8x128xf32> to vector<8x128xf32>
    %cst_37 = arith.constant dense<0.000000e+00> : vector<8x128xf32>
    %42 = tpu.matmul %36, %9, %cst_37 {dimension_numbers = #tpu.dot_dimension_numbers<[1], [0], [0], [1], [0, 0, 1, 1], [], []>} : vector<8x128xf32>, vector<128x128xf32>, vector<8x128xf32> -> vector<8x128xf32>
    %43 = arith.addf %41, %42 : vector<8x128xf32>
    %44 = math.tanh %43 : vector<8x128xf32>
    %c4_38 = arith.constant 4 : index
    %c0_39 = arith.constant 0 : index
    %c0_40 = arith.constant 0 : index
    %45 = vector.load %arg11[%c4_38, %c0_39, %c0_40] : memref<8x8x128xf32, #tpu.memory_space<vmem>>, vector<1x8x128xf32>
    %46 = vector.shape_cast %45 : vector<1x8x128xf32> to vector<8x128xf32>
    %47 = vector.shape_cast %44 : vector<8x128xf32> to vector<1x8x128xf32>
    tpu.vector_store %arg11[%c4_38, %c0_39, %c0_40], %47 {strides = array<i32>} : memref<8x8x128xf32, #tpu.memory_space<vmem>>, vector<1x8x128xf32>,
    %c5 = arith.constant 5 : index
    %c0_41 = arith.constant 0 : index
    %c0_42 = arith.constant 0 : index
    %48 = vector.load %arg10[%c5, %c0_41, %c0_42] : memref<8x8x128xf32, #tpu.memory_space<vmem>>, vector<1x8x128xf32>
    %49 = vector.shape_cast %48 : vector<1x8x128xf32> to vector<8x128xf32>
    %cst_43 = arith.constant dense<0.000000e+00> : vector<8x128xf32>
    %50 = tpu.matmul %44, %9, %cst_43 {dimension_numbers = #tpu.dot_dimension_numbers<[1], [0], [0], [1], [0, 0, 1, 1], [], []>} : vector<8x128xf32>, vector<128x128xf32>, vector<8x128xf32> -> vector<8x128xf32>
    %51 = arith.addf %49, %50 : vector<8x128xf32>
    %52 = math.tanh %51 : vector<8x128xf32>
    %c5_44 = arith.constant 5 : index
    %c0_45 = arith.constant 0 : index
    %c0_46 = arith.constant 0 : index
    %53 = vector.load %arg11[%c5_44, %c0_45, %c0_46] : memref<8x8x128xf32, #tpu.memory_space<vmem>>, vector<1x8x128xf32>
    %54 = vector.shape_cast %53 : vector<1x8x128xf32> to vector<8x128xf32>
    %55 = vector.shape_cast %52 : vector<8x128xf32> to vector<1x8x128xf32>
    tpu.vector_store %arg11[%c5_44, %c0_45, %c0_46], %55 {strides = array<i32>} : memref<8x8x128xf32, #tpu.memory_space<vmem>>, vector<1x8x128xf32>,
    %c6 = arith.constant 6 : index
    %c0_47 = arith.constant 0 : index
    %c0_48 = arith.constant 0 : index
    %56 = vector.load %arg10[%c6, %c0_47, %c0_48] : memref<8x8x128xf32, #tpu.memory_space<vmem>>, vector<1x8x128xf32>
    %57 = vector.shape_cast %56 : vector<1x8x128xf32> to vector<8x128xf32>
    %cst_49 = arith.constant dense<0.000000e+00> : vector<8x128xf32>
    %58 = tpu.matmul %52, %9, %cst_49 {dimension_numbers = #tpu.dot_dimension_numbers<[1], [0], [0], [1], [0, 0, 1, 1], [], []>} : vector<8x128xf32>, vector<128x128xf32>, vector<8x128xf32> -> vector<8x128xf32>
    %59 = arith.addf %57, %58 : vector<8x128xf32>
    %60 = math.tanh %59 : vector<8x128xf32>
    %c6_50 = arith.constant 6 : index
    %c0_51 = arith.constant 0 : index
    %c0_52 = arith.constant 0 : index
    %61 = vector.load %arg11[%c6_50, %c0_51, %c0_52] : memref<8x8x128xf32, #tpu.memory_space<vmem>>, vector<1x8x128xf32>
    %62 = vector.shape_cast %61 : vector<1x8x128xf32> to vector<8x128xf32>
    %63 = vector.shape_cast %60 : vector<8x128xf32> to vector<1x8x128xf32>
    tpu.vector_store %arg11[%c6_50, %c0_51, %c0_52], %63 {strides = array<i32>} : memref<8x8x128xf32, #tpu.memory_space<vmem>>, vector<1x8x128xf32>,
    %c7 = arith.constant 7 : index
    %c0_53 = arith.constant 0 : index
    %c0_54 = arith.constant 0 : index
    %64 = vector.load %arg10[%c7, %c0_53, %c0_54] : memref<8x8x128xf32, #tpu.memory_space<vmem>>, vector<1x8x128xf32>
    %65 = vector.shape_cast %64 : vector<1x8x128xf32> to vector<8x128xf32>
    %cst_55 = arith.constant dense<0.000000e+00> : vector<8x128xf32>
    %66 = tpu.matmul %60, %9, %cst_55 {dimension_numbers = #tpu.dot_dimension_numbers<[1], [0], [0], [1], [0, 0, 1, 1], [], []>} : vector<8x128xf32>, vector<128x128xf32>, vector<8x128xf32> -> vector<8x128xf32>
    %67 = arith.addf %65, %66 : vector<8x128xf32>
    %68 = math.tanh %67 : vector<8x128xf32>
    %c7_56 = arith.constant 7 : index
    %c0_57 = arith.constant 0 : index
    %c0_58 = arith.constant 0 : index
    %69 = vector.load %arg11[%c7_56, %c0_57, %c0_58] : memref<8x8x128xf32, #tpu.memory_space<vmem>>, vector<1x8x128xf32>
    %70 = vector.shape_cast %69 : vector<1x8x128xf32> to vector<8x128xf32>
    %71 = vector.shape_cast %68 : vector<8x128xf32> to vector<1x8x128xf32>
    tpu.vector_store %arg11[%c7_56, %c0_57, %c0_58], %71 {strides = array<i32>} : memref<8x8x128xf32, #tpu.memory_space<vmem>>, vector<1x8x128xf32>,
    %c0_59 = arith.constant 0 : index
    %c0_60 = arith.constant 0 : index
    %c0_61 = arith.constant 0 : index
    %72 = vector.load %arg11[%c0_59, %c0_60, %c0_61] : memref<8x8x128xf32, #tpu.memory_space<vmem>>, vector<8x8x128xf32>
    %73 = vector.shape_cast %72 : vector<8x8x128xf32> to vector<64x128xf32>
    %c0_62 = arith.constant 0 : index
    %c0_63 = arith.constant 0 : index
    %74 = vector.load %arg2[%c0_62, %c0_63] : memref<128x128xf32, #tpu.memory_space<vmem>>, vector<128x128xf32>
    %cst_64 = arith.constant dense<0.000000e+00> : vector<64x128xf32>
    %75 = tpu.matmul %73, %74, %cst_64 {dimension_numbers = #tpu.dot_dimension_numbers<[1], [0], [0], [1], [0, 0, 1, 1], [], []>} : vector<64x128xf32>, vector<128x128xf32>, vector<64x128xf32> -> vector<64x128xf32>
    %c0_65 = arith.constant 0 : index
    %c0_66 = arith.constant 0 : index
    %76 = vector.load %arg6[%c0_65, %c0_66] : memref<1x128xf32, #tpu.memory_space<vmem>>, vector<1x128xf32>
    %77 = vector.broadcast %76 : vector<1x128xf32> to vector<64x128xf32>
    %78 = arith.addf %75, %77 : vector<64x128xf32>
    %79 = vector.shape_cast %78 : vector<64x128xf32> to vector<8x8x128xf32>
    %c0_67 = arith.constant 0 : index
    %c0_68 = arith.constant 0 : index
    %c0_69 = arith.constant 0 : index
    %80 = vector.load %arg10[%c0_67, %c0_68, %c0_69] : memref<8x8x128xf32, #tpu.memory_space<vmem>>, vector<8x8x128xf32>
    tpu.vector_store %arg10[%c0_67, %c0_68, %c0_69], %79 {strides = array<i32>} : memref<8x8x128xf32, #tpu.memory_space<vmem>>, vector<8x8x128xf32>,
    %c0_70 = arith.constant 0 : index
    %c0_71 = arith.constant 0 : index
    %81 = vector.load %arg4[%c0_70, %c0_71] : memref<128x128xf32, #tpu.memory_space<vmem>>, vector<128x128xf32>
    %c0_72 = arith.constant 0 : index
    %c0_73 = arith.constant 0 : index
    %c0_74 = arith.constant 0 : index
    %82 = vector.load %arg10[%c0_72, %c0_73, %c0_74] : memref<8x8x128xf32, #tpu.memory_space<vmem>>, vector<1x8x128xf32>
    %83 = vector.shape_cast %82 : vector<1x8x128xf32> to vector<8x128xf32>
    %84 = math.tanh %83 : vector<8x128xf32>
    %c1_75 = arith.constant 1 : index
    %c0_76 = arith.constant 0 : index
    %c0_77 = arith.constant 0 : index
    %85 = vector.load %arg10[%c1_75, %c0_76, %c0_77] : memref<8x8x128xf32, #tpu.memory_space<vmem>>, vector<1x8x128xf32>
    %86 = vector.shape_cast %85 : vector<1x8x128xf32> to vector<8x128xf32>
    %cst_78 = arith.constant dense<0.000000e+00> : vector<8x128xf32>
    %87 = tpu.matmul %84, %81, %cst_78 {dimension_numbers = #tpu.dot_dimension_numbers<[1], [0], [0], [1], [0, 0, 1, 1], [], []>} : vector<8x128xf32>, vector<128x128xf32>, vector<8x128xf32> -> vector<8x128xf32>
    %88 = arith.addf %86, %87 : vector<8x128xf32>
    %89 = math.tanh %88 : vector<8x128xf32>
    %c2_79 = arith.constant 2 : index
    %c0_80 = arith.constant 0 : index
    %c0_81 = arith.constant 0 : index
    %90 = vector.load %arg10[%c2_79, %c0_80, %c0_81] : memref<8x8x128xf32, #tpu.memory_space<vmem>>, vector<1x8x128xf32>
    %91 = vector.shape_cast %90 : vector<1x8x128xf32> to vector<8x128xf32>
    %cst_82 = arith.constant dense<0.000000e+00> : vector<8x128xf32>
    %92 = tpu.matmul %89, %81, %cst_82 {dimension_numbers = #tpu.dot_dimension_numbers<[1], [0], [0], [1], [0, 0, 1, 1], [], []>} : vector<8x128xf32>, vector<128x128xf32>, vector<8x128xf32> -> vector<8x128xf32>
    %93 = arith.addf %91, %92 : vector<8x128xf32>
    %94 = math.tanh %93 : vector<8x128xf32>
    %c3_83 = arith.constant 3 : index
    %c0_84 = arith.constant 0 : index
    %c0_85 = arith.constant 0 : index
    %95 = vector.load %arg10[%c3_83, %c0_84, %c0_85] : memref<8x8x128xf32, #tpu.memory_space<vmem>>, vector<1x8x128xf32>
    %96 = vector.shape_cast %95 : vector<1x8x128xf32> to vector<8x128xf32>
    %cst_86 = arith.constant dense<0.000000e+00> : vector<8x128xf32>
    %97 = tpu.matmul %94, %81, %cst_86 {dimension_numbers = #tpu.dot_dimension_numbers<[1], [0], [0], [1], [0, 0, 1, 1], [], []>} : vector<8x128xf32>, vector<128x128xf32>, vector<8x128xf32> -> vector<8x128xf32>
    %98 = arith.addf %96, %97 : vector<8x128xf32>
    %99 = math.tanh %98 : vector<8x128xf32>
    %c4_87 = arith.constant 4 : index
    %c0_88 = arith.constant 0 : index
    %c0_89 = arith.constant 0 : index
    %100 = vector.load %arg10[%c4_87, %c0_88, %c0_89] : memref<8x8x128xf32, #tpu.memory_space<vmem>>, vector<1x8x128xf32>
    %101 = vector.shape_cast %100 : vector<1x8x128xf32> to vector<8x128xf32>
    %cst_90 = arith.constant dense<0.000000e+00> : vector<8x128xf32>
    %102 = tpu.matmul %99, %81, %cst_90 {dimension_numbers = #tpu.dot_dimension_numbers<[1], [0], [0], [1], [0, 0, 1, 1], [], []>} : vector<8x128xf32>, vector<128x128xf32>, vector<8x128xf32> -> vector<8x128xf32>
    %103 = arith.addf %101, %102 : vector<8x128xf32>
    %104 = math.tanh %103 : vector<8x128xf32>
    %c5_91 = arith.constant 5 : index
    %c0_92 = arith.constant 0 : index
    %c0_93 = arith.constant 0 : index
    %105 = vector.load %arg10[%c5_91, %c0_92, %c0_93] : memref<8x8x128xf32, #tpu.memory_space<vmem>>, vector<1x8x128xf32>
    %106 = vector.shape_cast %105 : vector<1x8x128xf32> to vector<8x128xf32>
    %cst_94 = arith.constant dense<0.000000e+00> : vector<8x128xf32>
    %107 = tpu.matmul %104, %81, %cst_94 {dimension_numbers = #tpu.dot_dimension_numbers<[1], [0], [0], [1], [0, 0, 1, 1], [], []>} : vector<8x128xf32>, vector<128x128xf32>, vector<8x128xf32> -> vector<8x128xf32>
    %108 = arith.addf %106, %107 : vector<8x128xf32>
    %109 = math.tanh %108 : vector<8x128xf32>
    %c6_95 = arith.constant 6 : index
    %c0_96 = arith.constant 0 : index
    %c0_97 = arith.constant 0 : index
    %110 = vector.load %arg10[%c6_95, %c0_96, %c0_97] : memref<8x8x128xf32, #tpu.memory_space<vmem>>, vector<1x8x128xf32>
    %111 = vector.shape_cast %110 : vector<1x8x128xf32> to vector<8x128xf32>
    %cst_98 = arith.constant dense<0.000000e+00> : vector<8x128xf32>
    %112 = tpu.matmul %109, %81, %cst_98 {dimension_numbers = #tpu.dot_dimension_numbers<[1], [0], [0], [1], [0, 0, 1, 1], [], []>} : vector<8x128xf32>, vector<128x128xf32>, vector<8x128xf32> -> vector<8x128xf32>
    %113 = arith.addf %111, %112 : vector<8x128xf32>
    %114 = math.tanh %113 : vector<8x128xf32>
    %c7_99 = arith.constant 7 : index
    %c0_100 = arith.constant 0 : index
    %c0_101 = arith.constant 0 : index
    %115 = vector.load %arg10[%c7_99, %c0_100, %c0_101] : memref<8x8x128xf32, #tpu.memory_space<vmem>>, vector<1x8x128xf32>
    %116 = vector.shape_cast %115 : vector<1x8x128xf32> to vector<8x128xf32>
    %cst_102 = arith.constant dense<0.000000e+00> : vector<8x128xf32>
    %117 = tpu.matmul %114, %81, %cst_102 {dimension_numbers = #tpu.dot_dimension_numbers<[1], [0], [0], [1], [0, 0, 1, 1], [], []>} : vector<8x128xf32>, vector<128x128xf32>, vector<8x128xf32> -> vector<8x128xf32>
    %118 = arith.addf %116, %117 : vector<8x128xf32>
    %119 = math.tanh %118 : vector<8x128xf32>
    %c0_103 = arith.constant 0 : index
    %c0_104 = arith.constant 0 : index
    %120 = vector.load %arg7[%c0_103, %c0_104] : memref<128x128xf32, #tpu.memory_space<vmem>>, vector<128x128xf32>
    %cst_105 = arith.constant dense<0.000000e+00> : vector<8x128xf32>
    %121 = tpu.matmul %119, %120, %cst_105 {dimension_numbers = #tpu.dot_dimension_numbers<[1], [0], [0], [1], [0, 0, 1, 1], [], []>} : vector<8x128xf32>, vector<128x128xf32>, vector<8x128xf32> -> vector<8x128xf32>
    %c0_106 = arith.constant 0 : index
    %c0_107 = arith.constant 0 : index
    %122 = vector.load %arg8[%c0_106, %c0_107] : memref<1x128xf32, #tpu.memory_space<vmem>>, vector<1x128xf32>
    %123 = vector.broadcast %122 : vector<1x128xf32> to vector<8x128xf32>
    %124 = arith.addf %121, %123 : vector<8x128xf32>
    %c0_108 = arith.constant 0 : index
    %c0_109 = arith.constant 0 : index
    %125 = vector.load %arg9[%c0_108, %c0_109] : memref<8x128xf32, #tpu.memory_space<vmem>>, vector<8x128xf32>
    tpu.vector_store %arg9[%c0_108, %c0_109], %124 {strides = array<i32>} : memref<8x128xf32, #tpu.memory_space<vmem>>, vector<8x128xf32>,
    return
  }
}

</mosaic_0001>

<llo_original>
// kernel: rnn_model_forward.1
$region0: #{rnn_model_forward.1}
  #allocation0 [shape = 'u32[]', space=smem, size = 0x4, offset = 0x4, fixed_abs, tag = 'smem constant byte address 0x4 - core index']
  #allocation1 [shape = 'u32[144,128]{1,0:T(1,128)}', space=vmem, size = 0x12000, scoped, tag = 'internal scratch']
  #allocation2 [shape = 'f32[8,8,128]{2,1,0:T(8,128)}', space=vmem, size = 0x8000, scoped, tag = 'scratch operand']
  #allocation3 [shape = 'f32[8,8,128]{2,1,0:T(8,128)}', space=vmem, size = 0x8000, scoped, tag = 'scratch operand']
  %s0 = inlined_call_operand.vmem [shape: f32[8,8,128], index: 0, kind: input, shape index: {}]
  %s1 = inlined_call_operand.vmem [shape: f32[128,128], index: 1, kind: input, shape index: {}]
  %s2 = inlined_call_operand.hbm [shape: f32[128,128], index: 2, kind: input, shape index: {}]
  %s3 = inlined_call_operand.hbm [shape: f32[128,128], index: 3, kind: input, shape index: {}]
  %s4 = inlined_call_operand.hbm [shape: f32[128,128], index: 4, kind: input, shape index: {}]
  %s5 = inlined_call_operand.vmem [shape: f32[1,128], index: 5, kind: input, shape index: {}]
  %s6 = inlined_call_operand.vmem [shape: f32[1,128], index: 6, kind: input, shape index: {}]
  %s7 = inlined_call_operand.hbm [shape: f32[128,128], index: 7, kind: input, shape index: {}]
  %s8 = inlined_call_operand.vmem [shape: f32[1,128], index: 8, kind: input, shape index: {}]
  %s9 = inlined_call_operand.vmem [shape: f32[8,128], index: 9, kind: output, shape index: {}]
  %s10 = sld [smem:[#allocation0]]
  $region62: #{rnn_model_forward.1} parent=0
    _
  %s12 = ssub.s32 1, %s10
  %s13 = scalar_select 0, %s12, %s10
  $region1: #{rnn_model_forward.1} parent=0
    #allocation4 [shape = 'u8[65536]{0}', space=vmem, size = 0x10000, scoped, tag = 'input window, operand 2, single buffered']
    #allocation5 [shape = 's32[1]{0}', space=sflag, size = 0x4, scoped, tag = 'scoped memory for rnn_model_forward.1']
    #allocation6 [shape = 'u8[65536]{0}', space=vmem, size = 0x10000, scoped, tag = 'input window, operand 3, single buffered']
    #allocation7 [shape = 's32[1]{0}', space=sflag, size = 0x4, scoped, tag = 'scoped memory for rnn_model_forward.1']
    #allocation8 [shape = 'u8[65536]{0}', space=vmem, size = 0x10000, scoped, tag = 'input window, operand 4, single buffered']
    #allocation9 [shape = 'u8[65536]{0}', space=vmem, size = 0x10000, scoped, tag = 'input window, operand 7, single buffered']
    #allocation10 [shape = 's32[1]{0}', space=sflag, size = 0x4, scoped, tag = 'scoped memory for rnn_model_forward.1']
    %14 = vsyncpa [#allocation5], 0
    %15 = vsyncpa [#allocation7], 0
    %16 = vsyncpa [#allocation10], 0
    // Predicated region
    $region2: #{rnn_model_forward.1} parent=1 // pred_check
      _
    $region3: #{rnn_model_forward.1} parent=1 // pred_check_branch
      %18 = sbr.rel (0) target = $region5
    $region4: #{rnn_model_forward.1} parent=1 // pred_region
      _
    $region5: #{rnn_model_forward.1} parent=1 // pred_fallthru
      _
    // Predicated region
    $region6: #{rnn_model_forward.1} parent=1 // pred_check
      _
    $region7: #{rnn_model_forward.1} parent=1 // pred_check_branch
      %20 = sbr.rel (0) target = $region9
    $region8: #{rnn_model_forward.1} parent=1 // pred_region
      _
    $region9: #{rnn_model_forward.1} parent=1 // pred_fallthru
      _
    // Predicated region
    $region10: #{rnn_model_forward.1} parent=1 // pred_check
      _
    $region11: #{rnn_model_forward.1} parent=1 // pred_check_branch
      %22 = sbr.rel (0) target = $region13
    $region12: #{rnn_model_forward.1} parent=1 // pred_region
      %s24 = ssub.s32 2048, 2048
      %25 = vsyncadd [#allocation5], %s24
      %s26 = sshll.u32 [#allocation4], 4
      %s27 = int_to_ptr.vmem [resolvable:$true] %s26
      %32 = dma.hbm_to_vmem [thread:$0]  %s2, 2048, %s27, [#allocation5], 128, 128, 8
    $region13: #{rnn_model_forward.1} parent=1 // pred_fallthru
      _
    // Predicated region
    $region14: #{rnn_model_forward.1} parent=1 // pred_check
      _
    $region15: #{rnn_model_forward.1} parent=1 // pred_check_branch
      %34 = sbr.rel (0) target = $region17
    $region16: #{rnn_model_forward.1} parent=1 // pred_region
      %s36 = ssub.s32 2048, 2048
      %37 = vsyncadd [#allocation7], %s36
      %s38 = sshll.u32 [#allocation6], 4
      %s39 = int_to_ptr.vmem [resolvable:$true] %s38
      %44 = dma.hbm_to_vmem [thread:$0]  %s3, 2048, %s39, [#allocation7], 128, 128, 8
    $region17: #{rnn_model_forward.1} parent=1 // pred_fallthru
      _
    // Predicated region
    $region18: #{rnn_model_forward.1} parent=1 // pred_check
      _
    $region19: #{rnn_model_forward.1} parent=1 // pred_check_branch
      %46 = sbr.rel (0) target = $region21
    $region20: #{rnn_model_forward.1} parent=1 // pred_region
      %s48 = ssub.s32 2048, 2048
      %49 = vsyncadd [#allocation7], %s48
      %s50 = sshll.u32 [#allocation8], 4
      %s51 = int_to_ptr.vmem [resolvable:$true] %s50
      %56 = dma.hbm_to_vmem [thread:$0]  %s4, 2048, %s51, [#allocation7], 128, 128, 8
    $region21: #{rnn_model_forward.1} parent=1 // pred_fallthru
      _
    // Predicated region
    $region22: #{rnn_model_forward.1} parent=1 // pred_check
      _
    $region23: #{rnn_model_forward.1} parent=1 // pred_check_branch
      %58 = sbr.rel (0) target = $region25
    $region24: #{rnn_model_forward.1} parent=1 // pred_region
      _
    $region25: #{rnn_model_forward.1} parent=1 // pred_fallthru
      _
    // Predicated region
    $region26: #{rnn_model_forward.1} parent=1 // pred_check
      _
    $region27: #{rnn_model_forward.1} parent=1 // pred_check_branch
      %60 = sbr.rel (0) target = $region29
    $region28: #{rnn_model_forward.1} parent=1 // pred_region
      _
    $region29: #{rnn_model_forward.1} parent=1 // pred_fallthru
      _
    // Predicated region
    $region30: #{rnn_model_forward.1} parent=1 // pred_check
      _
    $region31: #{rnn_model_forward.1} parent=1 // pred_check_branch
      %62 = sbr.rel (0) target = $region33
    $region32: #{rnn_model_forward.1} parent=1 // pred_region
      %s64 = ssub.s32 2048, 2048
      %65 = vsyncadd [#allocation10], %s64
      %s66 = sshll.u32 [#allocation9], 4
      %s67 = int_to_ptr.vmem [resolvable:$true] %s66
      %72 = dma.hbm_to_vmem [thread:$0]  %s7, 2048, %s67, [#allocation10], 128, 128, 8
    $region33: #{rnn_model_forward.1} parent=1 // pred_fallthru
      _
    // Predicated region
    $region34: #{rnn_model_forward.1} parent=1 // pred_check
      _
    $region35: #{rnn_model_forward.1} parent=1 // pred_check_branch
      %74 = sbr.rel (0) target = $region37
    $region36: #{rnn_model_forward.1} parent=1 // pred_region
      _
    $region37: #{rnn_model_forward.1} parent=1 // pred_fallthru
      _
    // Predicated region
    $region38: #{rnn_model_forward.1} parent=1 // pred_check
      _
    $region39: #{rnn_model_forward.1} parent=1 // pred_check_branch
      %76 = sbr.rel (0) target = $region41
    $region40: #{rnn_model_forward.1} parent=1 // pred_region
      %77 = dma.done [#allocation5], 2048
    $region41: #{rnn_model_forward.1} parent=1 // pred_fallthru
      _
    // Predicated region
    $region42: #{rnn_model_forward.1} parent=1 // pred_check
      _
    $region43: #{rnn_model_forward.1} parent=1 // pred_check_branch
      %79 = sbr.rel (0) target = $region45
    $region44: #{rnn_model_forward.1} parent=1 // pred_region
      %80 = dma.done [#allocation7], 2048
    $region45: #{rnn_model_forward.1} parent=1 // pred_fallthru
      _
    // Predicated region
    $region46: #{rnn_model_forward.1} parent=1 // pred_check
      _
    $region47: #{rnn_model_forward.1} parent=1 // pred_check_branch
      %82 = sbr.rel (0) target = $region49
    $region48: #{rnn_model_forward.1} parent=1 // pred_region
      %83 = dma.done [#allocation7], 2048
    $region49: #{rnn_model_forward.1} parent=1 // pred_fallthru
      _
    // Predicated region
    $region50: #{rnn_model_forward.1} parent=1 // pred_check
      _
    $region51: #{rnn_model_forward.1} parent=1 // pred_check_branch
      %85 = sbr.rel (0) target = $region53
    $region52: #{rnn_model_forward.1} parent=1 // pred_region
      %86 = dma.done [#allocation10], 2048
    $region53: #{rnn_model_forward.1} parent=1 // pred_fallthru
      _
    %v87 = vld [vmem:[%s0] sm:$0xff]
    %v88 = vld [vmem:[%s0 + $0x8] sm:$0xff]
    %v89 = vld [vmem:[%s0 + $0x10] sm:$0xff]
    %v90 = vld [vmem:[%s0 + $0x18] sm:$0xff]
    %v91 = vld [vmem:[%s0 + $0x20] sm:$0xff]
    %v92 = vld [vmem:[%s0 + $0x28] sm:$0xff]
    %v93 = vld [vmem:[%s0 + $0x30] sm:$0xff]
    %v94 = vld [vmem:[%s0 + $0x38] sm:$0xff]
    %v95 = vld [vmem:[%s1] sm:$0xff]
    %v96 = vld [vmem:[%s1 + $0x8] sm:$0xff]
    %v97 = vld [vmem:[%s1 + $0x10] sm:$0xff]
    %v98 = vld [vmem:[%s1 + $0x18] sm:$0xff]
    %v99 = vld [vmem:[%s1 + $0x20] sm:$0xff]
    %v100 = vld [vmem:[%s1 + $0x28] sm:$0xff]
    %v101 = vld [vmem:[%s1 + $0x30] sm:$0xff]
    %v102 = vld [vmem:[%s1 + $0x38] sm:$0xff]
    %v103 = vld [vmem:[%s1 + $0x40] sm:$0xff]
    %v104 = vld [vmem:[%s1 + $0x48] sm:$0xff]
    %v105 = vld [vmem:[%s1 + $0x50] sm:$0xff]
    %v106 = vld [vmem:[%s1 + $0x58] sm:$0xff]
    %v107 = vld [vmem:[%s1 + $0x60] sm:$0xff]
    %v108 = vld [vmem:[%s1 + $0x68] sm:$0xff]
    %v109 = vld [vmem:[%s1 + $0x70] sm:$0xff]
    %v110 = vld [vmem:[%s1 + $0x78] sm:$0xff]
    %v111 = vld [vmem:[%s5] sm:$0x1]
    %v113 = vlaneseq
    %v114 = vshrl.u32 %v113, 7
    %v115 = vsub.s32 0, %v114
    %v116 = vrot.slane %v111, %v115
    %118 = vmatprep.subr.mxu0 0.0
    %119 = vmatpush1.msra.mxu0 %v110
    %120 = vmatprep.subr.mxu0 0.0
    %121 = vmatpush1.msra.mxu0 %v109
    %122 = vmatprep.subr.mxu0 0.0
    %123 = vmatpush1.msra.mxu0 %v108
    %124 = vmatprep.subr.mxu0 0.0
    %125 = vmatpush1.msra.mxu0 %v107
    %126 = vmatprep.subr.mxu0 0.0
    %127 = vmatpush1.msra.mxu0 %v106
    %128 = vmatprep.subr.mxu0 0.0
    %129 = vmatpush1.msra.mxu0 %v105
    %130 = vmatprep.subr.mxu0 0.0
    %131 = vmatpush1.msra.mxu0 %v104
    %132 = vmatprep.subr.mxu0 0.0
    %133 = vmatpush1.msra.mxu0 %v103
    %134 = vmatprep.subr.mxu0 0.0
    %135 = vmatpush1.msra.mxu0 %v102
    %136 = vmatprep.subr.mxu0 0.0
    %137 = vmatpush1.msra.mxu0 %v101
    %138 = vmatprep.subr.mxu0 0.0
    %139 = vmatpush1.msra.mxu0 %v100
    %140 = vmatprep.subr.mxu0 0.0
    %141 = vmatpush1.msra.mxu0 %v99
    %142 = vmatprep.subr.mxu0 0.0
    %143 = vmatpush1.msra.mxu0 %v98
    %144 = vmatprep.subr.mxu0 0.0
    %145 = vmatpush1.msra.mxu0 %v97
    %146 = vmatprep.subr.mxu0 0.0
    %147 = vmatpush1.msra.mxu0 %v96
    %148 = vmatprep.subr.mxu0 0.0
    %149 = vmatpush1.msra.mxu0 %v95
    %150 = vmatprep.subr.mxu0 0.0
    %151 = vmatpush2.msra.mxu0 0.0
    %152 = vmatprep.subr.mxu0 0.0
    %153 = vmatpush2.msra.mxu0 0.0
    %154 = vmatprep.subr.mxu0 0.0
    %155 = vmatpush2.msra.mxu0 0.0
    %156 = vmatprep.subr.mxu0 0.0
    %157 = vmatpush2.msra.mxu0 0.0
    %158 = vmatprep.subr.mxu0 0.0
    %159 = vmatpush2.msra.mxu0 0.0
    %160 = vmatprep.subr.mxu0 0.0
    %161 = vmatpush2.msra.mxu0 0.0
    %162 = vmatprep.subr.mxu0 0.0
    %163 = vmatpush2.msra.mxu0 0.0
    %164 = vmatprep.subr.mxu0 0.0
    %165 = vmatpush2.msra.mxu0 0.0
    %166 = vmatprep.subr.mxu0 0.0
    %167 = vmatpush2.msra.mxu0 0.0
    %168 = vmatprep.subr.mxu0 0.0
    %169 = vmatpush2.msra.mxu0 0.0
    %170 = vmatprep.subr.mxu0 0.0
    %171 = vmatpush2.msra.mxu0 0.0
    %172 = vmatprep.subr.mxu0 0.0
    %173 = vmatpush2.msra.mxu0 0.0
    %174 = vmatprep.subr.mxu0 0.0
    %175 = vmatpush2.msra.mxu0 0.0
    %176 = vmatprep.subr.mxu0 0.0
    %177 = vmatpush2.msra.mxu0 0.0
    %178 = vmatprep.subr.mxu0 0.0
    %179 = vmatpush2.msra.mxu0 0.0
    %180 = vmatprep.subr.mxu0 0.0
    %181 = vmatpush2.msra.mxu0 0.0
    %182 = vmatprep.mubr.f32.mxu0 0.0
    %183 = vmatmul.mubr.f32.gmra.mxu0 %v87
    %v184 = vpop.f32.mrf.mxu0
    %v185 = vadd.f32 %v116, %v184
    %v186 = vpop.f32.mrf.mxu0
    %187 = vmatprep.mubr.f32.mxu0 0.0
    %188 = vmatmul.mubr.f32.gmra.mxu0 %v88
    %v189 = vpop.f32.mrf.mxu0
    %v190 = vadd.f32 %v116, %v189
    %v191 = vpop.f32.mrf.mxu0
    %192 = vmatprep.mubr.f32.mxu0 0.0
    %193 = vmatmul.mubr.f32.gmra.mxu0 %v89
    %v194 = vpop.f32.mrf.mxu0
    %v195 = vadd.f32 %v116, %v194
    %v196 = vpop.f32.mrf.mxu0
    %197 = vmatprep.mubr.f32.mxu0 0.0
    %198 = vmatmul.mubr.f32.gmra.mxu0 %v90
    %v199 = vpop.f32.mrf.mxu0
    %v200 = vadd.f32 %v116, %v199
    %v201 = vpop.f32.mrf.mxu0
    %202 = vmatprep.mubr.f32.mxu0 0.0
    %203 = vmatmul.mubr.f32.gmra.mxu0 %v91
    %v204 = vpop.f32.mrf.mxu0
    %v205 = vadd.f32 %v116, %v204
    %v206 = vpop.f32.mrf.mxu0
    %207 = vmatprep.mubr.f32.mxu0 0.0
    %208 = vmatmul.mubr.f32.gmra.mxu0 %v92
    %v209 = vpop.f32.mrf.mxu0
    %v210 = vadd.f32 %v116, %v209
    %v211 = vpop.f32.mrf.mxu0
    %212 = vmatprep.mubr.f32.mxu0 0.0
    %213 = vmatmul.mubr.f32.gmra.mxu0 %v93
    %v214 = vpop.f32.mrf.mxu0
    %v215 = vadd.f32 %v116, %v214
    %v216 = vpop.f32.mrf.mxu0
    %217 = vmatprep.mubr.f32.mxu0 0.0
    %218 = vmatmul.mubr.f32.gmra.mxu0 %v94
    %v219 = vpop.f32.mrf.mxu0
    %v220 = vadd.f32 %v116, %v219
    %v221 = vpop.f32.mrf.mxu0
    %222 = vdwg.mxu0
    %223 = vst [vmem:[#allocation2] sm:$0xff] %v185
    %224 = vst [vmem:[#allocation2 + $0x8] sm:$0xff] %v190
    %225 = vst [vmem:[#allocation2 + $0x10] sm:$0xff] %v195
    %226 = vst [vmem:[#allocation2 + $0x18] sm:$0xff] %v200
    %227 = vst [vmem:[#allocation2 + $0x20] sm:$0xff] %v205
    %228 = vst [vmem:[#allocation2 + $0x28] sm:$0xff] %v210
    %229 = vst [vmem:[#allocation2 + $0x30] sm:$0xff] %v215
    %230 = vst [vmem:[#allocation2 + $0x38] sm:$0xff] %v220
    %v231 = vld [vmem:[#allocation6] sm:$0xff]
    %v232 = vld [vmem:[#allocation6 + $0x8] sm:$0xff]
    %v233 = vld [vmem:[#allocation6 + $0x10] sm:$0xff]
    %v234 = vld [vmem:[#allocation6 + $0x18] sm:$0xff]
    %v235 = vld [vmem:[#allocation6 + $0x20] sm:$0xff]
    %v236 = vld [vmem:[#allocation6 + $0x28] sm:$0xff]
    %v237 = vld [vmem:[#allocation6 + $0x30] sm:$0xff]
    %v238 = vld [vmem:[#allocation6 + $0x38] sm:$0xff]
    %v239 = vld [vmem:[#allocation6 + $0x40] sm:$0xff]
    %v240 = vld [vmem:[#allocation6 + $0x48] sm:$0xff]
    %v241 = vld [vmem:[#allocation6 + $0x50] sm:$0xff]
    %v242 = vld [vmem:[#allocation6 + $0x58] sm:$0xff]
    %v243 = vld [vmem:[#allocation6 + $0x60] sm:$0xff]
    %v244 = vld [vmem:[#allocation6 + $0x68] sm:$0xff]
    %v245 = vld [vmem:[#allocation6 + $0x70] sm:$0xff]
    %v246 = vld [vmem:[#allocation6 + $0x78] sm:$0xff]
    %v247 = vld [vmem:[#allocation2] sm:$0xff]
    %v248 = vtanh.pop %v247
    %249 = vst [vmem:[#allocation3] sm:$0xff] %v248
    %s250 = scalar_lea.vmem [#allocation2], 8
    %v251 = vld [vmem:[%s250] sm:$0xff]
    %252 = vmatprep.subr.mxu0 0.0
    %253 = vmatpush1.msra.mxu0 %v246
    %254 = vmatprep.subr.mxu0 0.0
    %255 = vmatpush1.msra.mxu0 %v245
    %256 = vmatprep.subr.mxu0 0.0
    %257 = vmatpush1.msra.mxu0 %v244
    %258 = vmatprep.subr.mxu0 0.0
    %259 = vmatpush1.msra.mxu0 %v243
    %260 = vmatprep.subr.mxu0 0.0
    %261 = vmatpush1.msra.mxu0 %v242
    %262 = vmatprep.subr.mxu0 0.0
    %263 = vmatpush1.msra.mxu0 %v241
    %264 = vmatprep.subr.mxu0 0.0
    %265 = vmatpush1.msra.mxu0 %v240
    %266 = vmatprep.subr.mxu0 0.0
    %267 = vmatpush1.msra.mxu0 %v239
    %268 = vmatprep.subr.mxu0 0.0
    %269 = vmatpush1.msra.mxu0 %v238
    %270 = vmatprep.subr.mxu0 0.0
    %271 = vmatpush1.msra.mxu0 %v237
    %272 = vmatprep.subr.mxu0 0.0
    %273 = vmatpush1.msra.mxu0 %v236
    %274 = vmatprep.subr.mxu0 0.0
    %275 = vmatpush1.msra.mxu0 %v235
    %276 = vmatprep.subr.mxu0 0.0
    %277 = vmatpush1.msra.mxu0 %v234
    %278 = vmatprep.subr.mxu0 0.0
    %279 = vmatpush1.msra.mxu0 %v233
    %280 = vmatprep.subr.mxu0 0.0
    %281 = vmatpush1.msra.mxu0 %v232
    %282 = vmatprep.subr.mxu0 0.0
    %283 = vmatpush1.msra.mxu0 %v231
    %284 = vmatprep.subr.mxu0 0.0
    %285 = vmatpush2.msra.mxu0 0.0
    %286 = vmatprep.subr.mxu0 0.0
    %287 = vmatpush2.msra.mxu0 0.0
    %288 = vmatprep.subr.mxu0 0.0
    %289 = vmatpush2.msra.mxu0 0.0
    %290 = vmatprep.subr.mxu0 0.0
    %291 = vmatpush2.msra.mxu0 0.0
    %292 = vmatprep.subr.mxu0 0.0
    %293 = vmatpush2.msra.mxu0 0.0
    %294 = vmatprep.subr.mxu0 0.0
    %295 = vmatpush2.msra.mxu0 0.0
    %296 = vmatprep.subr.mxu0 0.0
    %297 = vmatpush2.msra.mxu0 0.0
    %298 = vmatprep.subr.mxu0 0.0
    %299 = vmatpush2.msra.mxu0 0.0
    %300 = vmatprep.subr.mxu0 0.0
    %301 = vmatpush2.msra.mxu0 0.0
    %302 = vmatprep.subr.mxu0 0.0
    %303 = vmatpush2.msra.mxu0 0.0
    %304 = vmatprep.subr.mxu0 0.0
    %305 = vmatpush2.msra.mxu0 0.0
    %306 = vmatprep.subr.mxu0 0.0
    %307 = vmatpush2.msra.mxu0 0.0
    %308 = vmatprep.subr.mxu0 0.0
    %309 = vmatpush2.msra.mxu0 0.0
    %310 = vmatprep.subr.mxu0 0.0
    %311 = vmatpush2.msra.mxu0 0.0
    %312 = vmatprep.subr.mxu0 0.0
    %313 = vmatpush2.msra.mxu0 0.0
    %314 = vmatprep.subr.mxu0 0.0
    %315 = vmatpush2.msra.mxu0 0.0
    %316 = vmatprep.mubr.f32.mxu0 0.0
    %317 = vmatmul.mubr.f32.gmra.mxu0 %v248
    %v318 = vpop.f32.mrf.mxu0
    %v319 = vadd.f32 0.0, %v318
    %v320 = vpop.f32.mrf.mxu0
    %321 = vdwg.mxu0
    %v322 = vadd.f32 %v251, %v319
    %v323 = vtanh.pop %v322
    %s324 = scalar_lea.vmem [#allocation3], 8
    %325 = vst [vmem:[%s324] sm:$0xff] %v323
    %s326 = scalar_lea.vmem [#allocation2], 16
    %v327 = vld [vmem:[%s326] sm:$0xff]
    %328 = vmatprep.subr.mxu0 0.0
    %329 = vmatpush1.msra.mxu0 %v246
    %330 = vmatprep.subr.mxu0 0.0
    %331 = vmatpush1.msra.mxu0 %v245
    %332 = vmatprep.subr.mxu0 0.0
    %333 = vmatpush1.msra.mxu0 %v244
    %334 = vmatprep.subr.mxu0 0.0
    %335 = vmatpush1.msra.mxu0 %v243
    %336 = vmatprep.subr.mxu0 0.0
    %337 = vmatpush1.msra.mxu0 %v242
    %338 = vmatprep.subr.mxu0 0.0
    %339 = vmatpush1.msra.mxu0 %v241
    %340 = vmatprep.subr.mxu0 0.0
    %341 = vmatpush1.msra.mxu0 %v240
    %342 = vmatprep.subr.mxu0 0.0
    %343 = vmatpush1.msra.mxu0 %v239
    %344 = vmatprep.subr.mxu0 0.0
    %345 = vmatpush1.msra.mxu0 %v238
    %346 = vmatprep.subr.mxu0 0.0
    %347 = vmatpush1.msra.mxu0 %v237
    %348 = vmatprep.subr.mxu0 0.0
    %349 = vmatpush1.msra.mxu0 %v236
    %350 = vmatprep.subr.mxu0 0.0
    %351 = vmatpush1.msra.mxu0 %v235
    %352 = vmatprep.subr.mxu0 0.0
    %353 = vmatpush1.msra.mxu0 %v234
    %354 = vmatprep.subr.mxu0 0.0
    %355 = vmatpush1.msra.mxu0 %v233
    %356 = vmatprep.subr.mxu0 0.0
    %357 = vmatpush1.msra.mxu0 %v232
    %358 = vmatprep.subr.mxu0 0.0
    %359 = vmatpush1.msra.mxu0 %v231
    %360 = vmatprep.subr.mxu0 0.0
    %361 = vmatpush2.msra.mxu0 0.0
    %362 = vmatprep.subr.mxu0 0.0
    %363 = vmatpush2.msra.mxu0 0.0
    %364 = vmatprep.subr.mxu0 0.0
    %365 = vmatpush2.msra.mxu0 0.0
    %366 = vmatprep.subr.mxu0 0.0
    %367 = vmatpush2.msra.mxu0 0.0
    %368 = vmatprep.subr.mxu0 0.0
    %369 = vmatpush2.msra.mxu0 0.0
    %370 = vmatprep.subr.mxu0 0.0
    %371 = vmatpush2.msra.mxu0 0.0
    %372 = vmatprep.subr.mxu0 0.0
    %373 = vmatpush2.msra.mxu0 0.0
    %374 = vmatprep.subr.mxu0 0.0
    %375 = vmatpush2.msra.mxu0 0.0
    %376 = vmatprep.subr.mxu0 0.0
    %377 = vmatpush2.msra.mxu0 0.0
    %378 = vmatprep.subr.mxu0 0.0
    %379 = vmatpush2.msra.mxu0 0.0
    %380 = vmatprep.subr.mxu0 0.0
    %381 = vmatpush2.msra.mxu0 0.0
    %382 = vmatprep.subr.mxu0 0.0
    %383 = vmatpush2.msra.mxu0 0.0
    %384 = vmatprep.subr.mxu0 0.0
    %385 = vmatpush2.msra.mxu0 0.0
    %386 = vmatprep.subr.mxu0 0.0
    %387 = vmatpush2.msra.mxu0 0.0
    %388 = vmatprep.subr.mxu0 0.0
    %389 = vmatpush2.msra.mxu0 0.0
    %390 = vmatprep.subr.mxu0 0.0
    %391 = vmatpush2.msra.mxu0 0.0
    %392 = vmatprep.mubr.f32.mxu0 0.0
    %393 = vmatmul.mubr.f32.gmra.mxu0 %v323
    %v394 = vpop.f32.mrf.mxu0
    %v395 = vadd.f32 0.0, %v394
    %v396 = vpop.f32.mrf.mxu0
    %397 = vdwg.mxu0
    %v398 = vadd.f32 %v327, %v395
    %v399 = vtanh.pop %v398
    %s400 = scalar_lea.vmem [#allocation3], 16
    %401 = vst [vmem:[%s400] sm:$0xff] %v399
    %s402 = scalar_lea.vmem [#allocation2], 24
    %v403 = vld [vmem:[%s402] sm:$0xff]
    %404 = vmatprep.subr.mxu0 0.0
    %405 = vmatpush1.msra.mxu0 %v246
    %406 = vmatprep.subr.mxu0 0.0
    %407 = vmatpush1.msra.mxu0 %v245
    %408 = vmatprep.subr.mxu0 0.0
    %409 = vmatpush1.msra.mxu0 %v244
    %410 = vmatprep.subr.mxu0 0.0
    %411 = vmatpush1.msra.mxu0 %v243
    %412 = vmatprep.subr.mxu0 0.0
    %413 = vmatpush1.msra.mxu0 %v242
    %414 = vmatprep.subr.mxu0 0.0
    %415 = vmatpush1.msra.mxu0 %v241
    %416 = vmatprep.subr.mxu0 0.0
    %417 = vmatpush1.msra.mxu0 %v240
    %418 = vmatprep.subr.mxu0 0.0
    %419 = vmatpush1.msra.mxu0 %v239
    %420 = vmatprep.subr.mxu0 0.0
    %421 = vmatpush1.msra.mxu0 %v238
    %422 = vmatprep.subr.mxu0 0.0
    %423 = vmatpush1.msra.mxu0 %v237
    %424 = vmatprep.subr.mxu0 0.0
    %425 = vmatpush1.msra.mxu0 %v236
    %426 = vmatprep.subr.mxu0 0.0
    %427 = vmatpush1.msra.mxu0 %v235
    %428 = vmatprep.subr.mxu0 0.0
    %429 = vmatpush1.msra.mxu0 %v234
    %430 = vmatprep.subr.mxu0 0.0
    %431 = vmatpush1.msra.mxu0 %v233
    %432 = vmatprep.subr.mxu0 0.0
    %433 = vmatpush1.msra.mxu0 %v232
    %434 = vmatprep.subr.mxu0 0.0
    %435 = vmatpush1.msra.mxu0 %v231
    %436 = vmatprep.subr.mxu0 0.0
    %437 = vmatpush2.msra.mxu0 0.0
    %438 = vmatprep.subr.mxu0 0.0
    %439 = vmatpush2.msra.mxu0 0.0
    %440 = vmatprep.subr.mxu0 0.0
    %441 = vmatpush2.msra.mxu0 0.0
    %442 = vmatprep.subr.mxu0 0.0
    %443 = vmatpush2.msra.mxu0 0.0
    %444 = vmatprep.subr.mxu0 0.0
    %445 = vmatpush2.msra.mxu0 0.0
    %446 = vmatprep.subr.mxu0 0.0
    %447 = vmatpush2.msra.mxu0 0.0
    %448 = vmatprep.subr.mxu0 0.0
    %449 = vmatpush2.msra.mxu0 0.0
    %450 = vmatprep.subr.mxu0 0.0
    %451 = vmatpush2.msra.mxu0 0.0
    %452 = vmatprep.subr.mxu0 0.0
    %453 = vmatpush2.msra.mxu0 0.0
    %454 = vmatprep.subr.mxu0 0.0
    %455 = vmatpush2.msra.mxu0 0.0
    %456 = vmatprep.subr.mxu0 0.0
    %457 = vmatpush2.msra.mxu0 0.0
    %458 = vmatprep.subr.mxu0 0.0
    %459 = vmatpush2.msra.mxu0 0.0
    %460 = vmatprep.subr.mxu0 0.0
    %461 = vmatpush2.msra.mxu0 0.0
    %462 = vmatprep.subr.mxu0 0.0
    %463 = vmatpush2.msra.mxu0 0.0
    %464 = vmatprep.subr.mxu0 0.0
    %465 = vmatpush2.msra.mxu0 0.0
    %466 = vmatprep.subr.mxu0 0.0
    %467 = vmatpush2.msra.mxu0 0.0
    %468 = vmatprep.mubr.f32.mxu0 0.0
    %469 = vmatmul.mubr.f32.gmra.mxu0 %v399
    %v470 = vpop.f32.mrf.mxu0
    %v471 = vadd.f32 0.0, %v470
    %v472 = vpop.f32.mrf.mxu0
    %473 = vdwg.mxu0
    %v474 = vadd.f32 %v403, %v471
    %v475 = vtanh.pop %v474
    %s476 = scalar_lea.vmem [#allocation3], 24
    %477 = vst [vmem:[%s476] sm:$0xff] %v475
    %s478 = scalar_lea.vmem [#allocation2], 32
    %v479 = vld [vmem:[%s478] sm:$0xff]
    %480 = vmatprep.subr.mxu0 0.0
    %481 = vmatpush1.msra.mxu0 %v246
    %482 = vmatprep.subr.mxu0 0.0
    %483 = vmatpush1.msra.mxu0 %v245
    %484 = vmatprep.subr.mxu0 0.0
    %485 = vmatpush1.msra.mxu0 %v244
    %486 = vmatprep.subr.mxu0 0.0
    %487 = vmatpush1.msra.mxu0 %v243
    %488 = vmatprep.subr.mxu0 0.0
    %489 = vmatpush1.msra.mxu0 %v242
    %490 = vmatprep.subr.mxu0 0.0
    %491 = vmatpush1.msra.mxu0 %v241
    %492 = vmatprep.subr.mxu0 0.0
    %493 = vmatpush1.msra.mxu0 %v240
    %494 = vmatprep.subr.mxu0 0.0
    %495 = vmatpush1.msra.mxu0 %v239
    %496 = vmatprep.subr.mxu0 0.0
    %497 = vmatpush1.msra.mxu0 %v238
    %498 = vmatprep.subr.mxu0 0.0
    %499 = vmatpush1.msra.mxu0 %v237
    %500 = vmatprep.subr.mxu0 0.0
    %501 = vmatpush1.msra.mxu0 %v236
    %502 = vmatprep.subr.mxu0 0.0
    %503 = vmatpush1.msra.mxu0 %v235
    %504 = vmatprep.subr.mxu0 0.0
    %505 = vmatpush1.msra.mxu0 %v234
    %506 = vmatprep.subr.mxu0 0.0
    %507 = vmatpush1.msra.mxu0 %v233
    %508 = vmatprep.subr.mxu0 0.0
    %509 = vmatpush1.msra.mxu0 %v232
    %510 = vmatprep.subr.mxu0 0.0
    %511 = vmatpush1.msra.mxu0 %v231
    %512 = vmatprep.subr.mxu0 0.0
    %513 = vmatpush2.msra.mxu0 0.0
    %514 = vmatprep.subr.mxu0 0.0
    %515 = vmatpush2.msra.mxu0 0.0
    %516 = vmatprep.subr.mxu0 0.0
    %517 = vmatpush2.msra.mxu0 0.0
    %518 = vmatprep.subr.mxu0 0.0
    %519 = vmatpush2.msra.mxu0 0.0
    %520 = vmatprep.subr.mxu0 0.0
    %521 = vmatpush2.msra.mxu0 0.0
    %522 = vmatprep.subr.mxu0 0.0
    %523 = vmatpush2.msra.mxu0 0.0
    %524 = vmatprep.subr.mxu0 0.0
    %525 = vmatpush2.msra.mxu0 0.0
    %526 = vmatprep.subr.mxu0 0.0
    %527 = vmatpush2.msra.mxu0 0.0
    %528 = vmatprep.subr.mxu0 0.0
    %529 = vmatpush2.msra.mxu0 0.0
    %530 = vmatprep.subr.mxu0 0.0
    %531 = vmatpush2.msra.mxu0 0.0
    %532 = vmatprep.subr.mxu0 0.0
    %533 = vmatpush2.msra.mxu0 0.0
    %534 = vmatprep.subr.mxu0 0.0
    %535 = vmatpush2.msra.mxu0 0.0
    %536 = vmatprep.subr.mxu0 0.0
    %537 = vmatpush2.msra.mxu0 0.0
    %538 = vmatprep.subr.mxu0 0.0
    %539 = vmatpush2.msra.mxu0 0.0
    %540 = vmatprep.subr.mxu0 0.0
    %541 = vmatpush2.msra.mxu0 0.0
    %542 = vmatprep.subr.mxu0 0.0
    %543 = vmatpush2.msra.mxu0 0.0
    %544 = vmatprep.mubr.f32.mxu0 0.0
    %545 = vmatmul.mubr.f32.gmra.mxu0 %v475
    %v546 = vpop.f32.mrf.mxu0
    %v547 = vadd.f32 0.0, %v546
    %v548 = vpop.f32.mrf.mxu0
    %549 = vdwg.mxu0
    %v550 = vadd.f32 %v479, %v547
    %v551 = vtanh.pop %v550
    %s552 = scalar_lea.vmem [#allocation3], 32
    %553 = vst [vmem:[%s552] sm:$0xff] %v551
    %s554 = scalar_lea.vmem [#allocation2], 40
    %v555 = vld [vmem:[%s554] sm:$0xff]
    %556 = vmatprep.subr.mxu0 0.0
    %557 = vmatpush1.msra.mxu0 %v246
    %558 = vmatprep.subr.mxu0 0.0
    %559 = vmatpush1.msra.mxu0 %v245
    %560 = vmatprep.subr.mxu0 0.0
    %561 = vmatpush1.msra.mxu0 %v244
    %562 = vmatprep.subr.mxu0 0.0
    %563 = vmatpush1.msra.mxu0 %v243
    %564 = vmatprep.subr.mxu0 0.0
    %565 = vmatpush1.msra.mxu0 %v242
    %566 = vmatprep.subr.mxu0 0.0
    %567 = vmatpush1.msra.mxu0 %v241
    %568 = vmatprep.subr.mxu0 0.0
    %569 = vmatpush1.msra.mxu0 %v240
    %570 = vmatprep.subr.mxu0 0.0
    %571 = vmatpush1.msra.mxu0 %v239
    %572 = vmatprep.subr.mxu0 0.0
    %573 = vmatpush1.msra.mxu0 %v238
    %574 = vmatprep.subr.mxu0 0.0
    %575 = vmatpush1.msra.mxu0 %v237
    %576 = vmatprep.subr.mxu0 0.0
    %577 = vmatpush1.msra.mxu0 %v236
    %578 = vmatprep.subr.mxu0 0.0
    %579 = vmatpush1.msra.mxu0 %v235
    %580 = vmatprep.subr.mxu0 0.0
    %581 = vmatpush1.msra.mxu0 %v234
    %582 = vmatprep.subr.mxu0 0.0
    %583 = vmatpush1.msra.mxu0 %v233
    %584 = vmatprep.subr.mxu0 0.0
    %585 = vmatpush1.msra.mxu0 %v232
    %586 = vmatprep.subr.mxu0 0.0
    %587 = vmatpush1.msra.mxu0 %v231
    %588 = vmatprep.subr.mxu0 0.0
    %589 = vmatpush2.msra.mxu0 0.0
    %590 = vmatprep.subr.mxu0 0.0
    %591 = vmatpush2.msra.mxu0 0.0
    %592 = vmatprep.subr.mxu0 0.0
    %593 = vmatpush2.msra.mxu0 0.0
    %594 = vmatprep.subr.mxu0 0.0
    %595 = vmatpush2.msra.mxu0 0.0
    %596 = vmatprep.subr.mxu0 0.0
    %597 = vmatpush2.msra.mxu0 0.0
    %598 = vmatprep.subr.mxu0 0.0
    %599 = vmatpush2.msra.mxu0 0.0
    %600 = vmatprep.subr.mxu0 0.0
    %601 = vmatpush2.msra.mxu0 0.0
    %602 = vmatprep.subr.mxu0 0.0
    %603 = vmatpush2.msra.mxu0 0.0
    %604 = vmatprep.subr.mxu0 0.0
    %605 = vmatpush2.msra.mxu0 0.0
    %606 = vmatprep.subr.mxu0 0.0
    %607 = vmatpush2.msra.mxu0 0.0
    %608 = vmatprep.subr.mxu0 0.0
    %609 = vmatpush2.msra.mxu0 0.0
    %610 = vmatprep.subr.mxu0 0.0
    %611 = vmatpush2.msra.mxu0 0.0
    %612 = vmatprep.subr.mxu0 0.0
    %613 = vmatpush2.msra.mxu0 0.0
    %614 = vmatprep.subr.mxu0 0.0
    %615 = vmatpush2.msra.mxu0 0.0
    %616 = vmatprep.subr.mxu0 0.0
    %617 = vmatpush2.msra.mxu0 0.0
    %618 = vmatprep.subr.mxu0 0.0
    %619 = vmatpush2.msra.mxu0 0.0
    %620 = vmatprep.mubr.f32.mxu0 0.0
    %621 = vmatmul.mubr.f32.gmra.mxu0 %v551
    %v622 = vpop.f32.mrf.mxu0
    %v623 = vadd.f32 0.0, %v622
    %v624 = vpop.f32.mrf.mxu0
    %625 = vdwg.mxu0
    %v626 = vadd.f32 %v555, %v623
    %v627 = vtanh.pop %v626
    %s628 = scalar_lea.vmem [#allocation3], 40
    %629 = vst [vmem:[%s628] sm:$0xff] %v627
    %s630 = scalar_lea.vmem [#allocation2], 48
    %v631 = vld [vmem:[%s630] sm:$0xff]
    %632 = vmatprep.subr.mxu0 0.0
    %633 = vmatpush1.msra.mxu0 %v246
    %634 = vmatprep.subr.mxu0 0.0
    %635 = vmatpush1.msra.mxu0 %v245
    %636 = vmatprep.subr.mxu0 0.0
    %637 = vmatpush1.msra.mxu0 %v244
    %638 = vmatprep.subr.mxu0 0.0
    %639 = vmatpush1.msra.mxu0 %v243
    %640 = vmatprep.subr.mxu0 0.0
    %641 = vmatpush1.msra.mxu0 %v242
    %642 = vmatprep.subr.mxu0 0.0
    %643 = vmatpush1.msra.mxu0 %v241
    %644 = vmatprep.subr.mxu0 0.0
    %645 = vmatpush1.msra.mxu0 %v240
    %646 = vmatprep.subr.mxu0 0.0
    %647 = vmatpush1.msra.mxu0 %v239
    %648 = vmatprep.subr.mxu0 0.0
    %649 = vmatpush1.msra.mxu0 %v238
    %650 = vmatprep.subr.mxu0 0.0
    %651 = vmatpush1.msra.mxu0 %v237
    %652 = vmatprep.subr.mxu0 0.0
    %653 = vmatpush1.msra.mxu0 %v236
    %654 = vmatprep.subr.mxu0 0.0
    %655 = vmatpush1.msra.mxu0 %v235
    %656 = vmatprep.subr.mxu0 0.0
    %657 = vmatpush1.msra.mxu0 %v234
    %658 = vmatprep.subr.mxu0 0.0
    %659 = vmatpush1.msra.mxu0 %v233
    %660 = vmatprep.subr.mxu0 0.0
    %661 = vmatpush1.msra.mxu0 %v232
    %662 = vmatprep.subr.mxu0 0.0
    %663 = vmatpush1.msra.mxu0 %v231
    %664 = vmatprep.subr.mxu0 0.0
    %665 = vmatpush2.msra.mxu0 0.0
    %666 = vmatprep.subr.mxu0 0.0
    %667 = vmatpush2.msra.mxu0 0.0
    %668 = vmatprep.subr.mxu0 0.0
    %669 = vmatpush2.msra.mxu0 0.0
    %670 = vmatprep.subr.mxu0 0.0
    %671 = vmatpush2.msra.mxu0 0.0
    %672 = vmatprep.subr.mxu0 0.0
    %673 = vmatpush2.msra.mxu0 0.0
    %674 = vmatprep.subr.mxu0 0.0
    %675 = vmatpush2.msra.mxu0 0.0
    %676 = vmatprep.subr.mxu0 0.0
    %677 = vmatpush2.msra.mxu0 0.0
    %678 = vmatprep.subr.mxu0 0.0
    %679 = vmatpush2.msra.mxu0 0.0
    %680 = vmatprep.subr.mxu0 0.0
    %681 = vmatpush2.msra.mxu0 0.0
    %682 = vmatprep.subr.mxu0 0.0
    %683 = vmatpush2.msra.mxu0 0.0
    %684 = vmatprep.subr.mxu0 0.0
    %685 = vmatpush2.msra.mxu0 0.0
    %686 = vmatprep.subr.mxu0 0.0
    %687 = vmatpush2.msra.mxu0 0.0
    %688 = vmatprep.subr.mxu0 0.0
    %689 = vmatpush2.msra.mxu0 0.0
    %690 = vmatprep.subr.mxu0 0.0
    %691 = vmatpush2.msra.mxu0 0.0
    %692 = vmatprep.subr.mxu0 0.0
    %693 = vmatpush2.msra.mxu0 0.0
    %694 = vmatprep.subr.mxu0 0.0
    %695 = vmatpush2.msra.mxu0 0.0
    %696 = vmatprep.mubr.f32.mxu0 0.0
    %697 = vmatmul.mubr.f32.gmra.mxu0 %v627
    %v698 = vpop.f32.mrf.mxu0
    %v699 = vadd.f32 0.0, %v698
    %v700 = vpop.f32.mrf.mxu0
    %701 = vdwg.mxu0
    %v702 = vadd.f32 %v631, %v699
    %v703 = vtanh.pop %v702
    %s704 = scalar_lea.vmem [#allocation3], 48
    %705 = vst [vmem:[%s704] sm:$0xff] %v703
    %s706 = scalar_lea.vmem [#allocation2], 56
    %v707 = vld [vmem:[%s706] sm:$0xff]
    %708 = vmatprep.subr.mxu0 0.0
    %709 = vmatpush1.msra.mxu0 %v246
    %710 = vmatprep.subr.mxu0 0.0
    %711 = vmatpush1.msra.mxu0 %v245
    %712 = vmatprep.subr.mxu0 0.0
    %713 = vmatpush1.msra.mxu0 %v244
    %714 = vmatprep.subr.mxu0 0.0
    %715 = vmatpush1.msra.mxu0 %v243
    %716 = vmatprep.subr.mxu0 0.0
    %717 = vmatpush1.msra.mxu0 %v242
    %718 = vmatprep.subr.mxu0 0.0
    %719 = vmatpush1.msra.mxu0 %v241
    %720 = vmatprep.subr.mxu0 0.0
    %721 = vmatpush1.msra.mxu0 %v240
    %722 = vmatprep.subr.mxu0 0.0
    %723 = vmatpush1.msra.mxu0 %v239
    %724 = vmatprep.subr.mxu0 0.0
    %725 = vmatpush1.msra.mxu0 %v238
    %726 = vmatprep.subr.mxu0 0.0
    %727 = vmatpush1.msra.mxu0 %v237
    %728 = vmatprep.subr.mxu0 0.0
    %729 = vmatpush1.msra.mxu0 %v236
    %730 = vmatprep.subr.mxu0 0.0
    %731 = vmatpush1.msra.mxu0 %v235
    %732 = vmatprep.subr.mxu0 0.0
    %733 = vmatpush1.msra.mxu0 %v234
    %734 = vmatprep.subr.mxu0 0.0
    %735 = vmatpush1.msra.mxu0 %v233
    %736 = vmatprep.subr.mxu0 0.0
    %737 = vmatpush1.msra.mxu0 %v232
    %738 = vmatprep.subr.mxu0 0.0
    %739 = vmatpush1.msra.mxu0 %v231
    %740 = vmatprep.subr.mxu0 0.0
    %741 = vmatpush2.msra.mxu0 0.0
    %742 = vmatprep.subr.mxu0 0.0
    %743 = vmatpush2.msra.mxu0 0.0
    %744 = vmatprep.subr.mxu0 0.0
    %745 = vmatpush2.msra.mxu0 0.0
    %746 = vmatprep.subr.mxu0 0.0
    %747 = vmatpush2.msra.mxu0 0.0
    %748 = vmatprep.subr.mxu0 0.0
    %749 = vmatpush2.msra.mxu0 0.0
    %750 = vmatprep.subr.mxu0 0.0
    %751 = vmatpush2.msra.mxu0 0.0
    %752 = vmatprep.subr.mxu0 0.0
    %753 = vmatpush2.msra.mxu0 0.0
    %754 = vmatprep.subr.mxu0 0.0
    %755 = vmatpush2.msra.mxu0 0.0
    %756 = vmatprep.subr.mxu0 0.0
    %757 = vmatpush2.msra.mxu0 0.0
    %758 = vmatprep.subr.mxu0 0.0
    %759 = vmatpush2.msra.mxu0 0.0
    %760 = vmatprep.subr.mxu0 0.0
    %761 = vmatpush2.msra.mxu0 0.0
    %762 = vmatprep.subr.mxu0 0.0
    %763 = vmatpush2.msra.mxu0 0.0
    %764 = vmatprep.subr.mxu0 0.0
    %765 = vmatpush2.msra.mxu0 0.0
    %766 = vmatprep.subr.mxu0 0.0
    %767 = vmatpush2.msra.mxu0 0.0
    %768 = vmatprep.subr.mxu0 0.0
    %769 = vmatpush2.msra.mxu0 0.0
    %770 = vmatprep.subr.mxu0 0.0
    %771 = vmatpush2.msra.mxu0 0.0
    %772 = vmatprep.mubr.f32.mxu0 0.0
    %773 = vmatmul.mubr.f32.gmra.mxu0 %v703
    %v774 = vpop.f32.mrf.mxu0
    %v775 = vadd.f32 0.0, %v774
    %v776 = vpop.f32.mrf.mxu0
    %777 = vdwg.mxu0
    %v778 = vadd.f32 %v707, %v775
    %v779 = vtanh.pop %v778
    %s780 = scalar_lea.vmem [#allocation3], 56
    %781 = vst [vmem:[%s780] sm:$0xff] %v779
    %v782 = vld [vmem:[#allocation3] sm:$0xff]
    %v783 = vld [vmem:[#allocation3 + $0x8] sm:$0xff]
    %v784 = vld [vmem:[#allocation3 + $0x10] sm:$0xff]
    %v785 = vld [vmem:[#allocation3 + $0x18] sm:$0xff]
    %v786 = vld [vmem:[#allocation3 + $0x20] sm:$0xff]
    %v787 = vld [vmem:[#allocation3 + $0x28] sm:$0xff]
    %v788 = vld [vmem:[#allocation3 + $0x30] sm:$0xff]
    %v789 = vld [vmem:[#allocation3 + $0x38] sm:$0xff]
    %v790 = vld [vmem:[#allocation4] sm:$0xff]
    %v791 = vld [vmem:[#allocation4 + $0x8] sm:$0xff]
    %v792 = vld [vmem:[#allocation4 + $0x10] sm:$0xff]
    %v793 = vld [vmem:[#allocation4 + $0x18] sm:$0xff]
    %v794 = vld [vmem:[#allocation4 + $0x20] sm:$0xff]
    %v795 = vld [vmem:[#allocation4 + $0x28] sm:$0xff]
    %v796 = vld [vmem:[#allocation4 + $0x30] sm:$0xff]
    %v797 = vld [vmem:[#allocation4 + $0x38] sm:$0xff]
    %v798 = vld [vmem:[#allocation4 + $0x40] sm:$0xff]
    %v799 = vld [vmem:[#allocation4 + $0x48] sm:$0xff]
    %v800 = vld [vmem:[#allocation4 + $0x50] sm:$0xff]
    %v801 = vld [vmem:[#allocation4 + $0x58] sm:$0xff]
    %v802 = vld [vmem:[#allocation4 + $0x60] sm:$0xff]
    %v803 = vld [vmem:[#allocation4 + $0x68] sm:$0xff]
    %v804 = vld [vmem:[#allocation4 + $0x70] sm:$0xff]
    %v805 = vld [vmem:[#allocation4 + $0x78] sm:$0xff]
    %v806 = vld [vmem:[%s6] sm:$0x1]
    %v808 = vlaneseq
    %v809 = vshrl.u32 %v808, 7
    %v810 = vsub.s32 0, %v809
    %v811 = vrot.slane %v806, %v810
    %813 = vmatprep.subr.mxu0 0.0
    %814 = vmatpush1.msra.mxu0 %v805
    %815 = vmatprep.subr.mxu0 0.0
    %816 = vmatpush1.msra.mxu0 %v804
    %817 = vmatprep.subr.mxu0 0.0
    %818 = vmatpush1.msra.mxu0 %v803
    %819 = vmatprep.subr.mxu0 0.0
    %820 = vmatpush1.msra.mxu0 %v802
    %821 = vmatprep.subr.mxu0 0.0
    %822 = vmatpush1.msra.mxu0 %v801
    %823 = vmatprep.subr.mxu0 0.0
    %824 = vmatpush1.msra.mxu0 %v800
    %825 = vmatprep.subr.mxu0 0.0
    %826 = vmatpush1.msra.mxu0 %v799
    %827 = vmatprep.subr.mxu0 0.0
    %828 = vmatpush1.msra.mxu0 %v798
    %829 = vmatprep.subr.mxu0 0.0
    %830 = vmatpush1.msra.mxu0 %v797
    %831 = vmatprep.subr.mxu0 0.0
    %832 = vmatpush1.msra.mxu0 %v796
    %833 = vmatprep.subr.mxu0 0.0
    %834 = vmatpush1.msra.mxu0 %v795
    %835 = vmatprep.subr.mxu0 0.0
    %836 = vmatpush1.msra.mxu0 %v794
    %837 = vmatprep.subr.mxu0 0.0
    %838 = vmatpush1.msra.mxu0 %v793
    %839 = vmatprep.subr.mxu0 0.0
    %840 = vmatpush1.msra.mxu0 %v792
    %841 = vmatprep.subr.mxu0 0.0
    %842 = vmatpush1.msra.mxu0 %v791
    %843 = vmatprep.subr.mxu0 0.0
    %844 = vmatpush1.msra.mxu0 %v790
    %845 = vmatprep.subr.mxu0 0.0
    %846 = vmatpush2.msra.mxu0 0.0
    %847 = vmatprep.subr.mxu0 0.0
    %848 = vmatpush2.msra.mxu0 0.0
    %849 = vmatprep.subr.mxu0 0.0
    %850 = vmatpush2.msra.mxu0 0.0
    %851 = vmatprep.subr.mxu0 0.0
    %852 = vmatpush2.msra.mxu0 0.0
    %853 = vmatprep.subr.mxu0 0.0
    %854 = vmatpush2.msra.mxu0 0.0
    %855 = vmatprep.subr.mxu0 0.0
    %856 = vmatpush2.msra.mxu0 0.0
    %857 = vmatprep.subr.mxu0 0.0
    %858 = vmatpush2.msra.mxu0 0.0
    %859 = vmatprep.subr.mxu0 0.0
    %860 = vmatpush2.msra.mxu0 0.0
    %861 = vmatprep.subr.mxu0 0.0
    %862 = vmatpush2.msra.mxu0 0.0
    %863 = vmatprep.subr.mxu0 0.0
    %864 = vmatpush2.msra.mxu0 0.0
    %865 = vmatprep.subr.mxu0 0.0
    %866 = vmatpush2.msra.mxu0 0.0
    %867 = vmatprep.subr.mxu0 0.0
    %868 = vmatpush2.msra.mxu0 0.0
    %869 = vmatprep.subr.mxu0 0.0
    %870 = vmatpush2.msra.mxu0 0.0
    %871 = vmatprep.subr.mxu0 0.0
    %872 = vmatpush2.msra.mxu0 0.0
    %873 = vmatprep.subr.mxu0 0.0
    %874 = vmatpush2.msra.mxu0 0.0
    %875 = vmatprep.subr.mxu0 0.0
    %876 = vmatpush2.msra.mxu0 0.0
    %877 = vmatprep.mubr.f32.mxu0 0.0
    %878 = vmatmul.mubr.f32.gmra.mxu0 %v782
    %v879 = vpop.f32.mrf.mxu0
    %v880 = vadd.f32 %v811, %v879
    %v881 = vpop.f32.mrf.mxu0
    %882 = vmatprep.mubr.f32.mxu0 0.0
    %883 = vmatmul.mubr.f32.gmra.mxu0 %v783
    %v884 = vpop.f32.mrf.mxu0
    %v885 = vadd.f32 %v811, %v884
    %v886 = vpop.f32.mrf.mxu0
    %887 = vmatprep.mubr.f32.mxu0 0.0
    %888 = vmatmul.mubr.f32.gmra.mxu0 %v784
    %v889 = vpop.f32.mrf.mxu0
    %v890 = vadd.f32 %v811, %v889
    %v891 = vpop.f32.mrf.mxu0
    %892 = vmatprep.mubr.f32.mxu0 0.0
    %893 = vmatmul.mubr.f32.gmra.mxu0 %v785
    %v894 = vpop.f32.mrf.mxu0
    %v895 = vadd.f32 %v811, %v894
    %v896 = vpop.f32.mrf.mxu0
    %897 = vmatprep.mubr.f32.mxu0 0.0
    %898 = vmatmul.mubr.f32.gmra.mxu0 %v786
    %v899 = vpop.f32.mrf.mxu0
    %v900 = vadd.f32 %v811, %v899
    %v901 = vpop.f32.mrf.mxu0
    %902 = vmatprep.mubr.f32.mxu0 0.0
    %903 = vmatmul.mubr.f32.gmra.mxu0 %v787
    %v904 = vpop.f32.mrf.mxu0
    %v905 = vadd.f32 %v811, %v904
    %v906 = vpop.f32.mrf.mxu0
    %907 = vmatprep.mubr.f32.mxu0 0.0
    %908 = vmatmul.mubr.f32.gmra.mxu0 %v788
    %v909 = vpop.f32.mrf.mxu0
    %v910 = vadd.f32 %v811, %v909
    %v911 = vpop.f32.mrf.mxu0
    %912 = vmatprep.mubr.f32.mxu0 0.0
    %913 = vmatmul.mubr.f32.gmra.mxu0 %v789
    %v914 = vpop.f32.mrf.mxu0
    %v915 = vadd.f32 %v811, %v914
    %v916 = vpop.f32.mrf.mxu0
    %917 = vdwg.mxu0
    %918 = vst [vmem:[#allocation2] sm:$0xff] %v880
    %919 = vst [vmem:[#allocation2 + $0x8] sm:$0xff] %v885
    %920 = vst [vmem:[#allocation2 + $0x10] sm:$0xff] %v890
    %921 = vst [vmem:[#allocation2 + $0x18] sm:$0xff] %v895
    %922 = vst [vmem:[#allocation2 + $0x20] sm:$0xff] %v900
    %923 = vst [vmem:[#allocation2 + $0x28] sm:$0xff] %v905
    %924 = vst [vmem:[#allocation2 + $0x30] sm:$0xff] %v910
    %925 = vst [vmem:[#allocation2 + $0x38] sm:$0xff] %v915
    %v926 = vld [vmem:[#allocation8] sm:$0xff]
    %v927 = vld [vmem:[#allocation8 + $0x8] sm:$0xff]
    %v928 = vld [vmem:[#allocation8 + $0x10] sm:$0xff]
    %v929 = vld [vmem:[#allocation8 + $0x18] sm:$0xff]
    %v930 = vld [vmem:[#allocation8 + $0x20] sm:$0xff]
    %v931 = vld [vmem:[#allocation8 + $0x28] sm:$0xff]
    %v932 = vld [vmem:[#allocation8 + $0x30] sm:$0xff]
    %v933 = vld [vmem:[#allocation8 + $0x38] sm:$0xff]
    %v934 = vld [vmem:[#allocation8 + $0x40] sm:$0xff]
    %v935 = vld [vmem:[#allocation8 + $0x48] sm:$0xff]
    %v936 = vld [vmem:[#allocation8 + $0x50] sm:$0xff]
    %v937 = vld [vmem:[#allocation8 + $0x58] sm:$0xff]
    %v938 = vld [vmem:[#allocation8 + $0x60] sm:$0xff]
    %v939 = vld [vmem:[#allocation8 + $0x68] sm:$0xff]
    %v940 = vld [vmem:[#allocation8 + $0x70] sm:$0xff]
    %v941 = vld [vmem:[#allocation8 + $0x78] sm:$0xff]
    %v942 = vld [vmem:[#allocation2] sm:$0xff]
    %v943 = vtanh.pop %v942
    %v944 = vld [vmem:[%s250] sm:$0xff]
    %945 = vmatprep.subr.mxu0 0.0
    %946 = vmatpush1.msra.mxu0 %v941
    %947 = vmatprep.subr.mxu0 0.0
    %948 = vmatpush1.msra.mxu0 %v940
    %949 = vmatprep.subr.mxu0 0.0
    %950 = vmatpush1.msra.mxu0 %v939
    %951 = vmatprep.subr.mxu0 0.0
    %952 = vmatpush1.msra.mxu0 %v938
    %953 = vmatprep.subr.mxu0 0.0
    %954 = vmatpush1.msra.mxu0 %v937
    %955 = vmatprep.subr.mxu0 0.0
    %956 = vmatpush1.msra.mxu0 %v936
    %957 = vmatprep.subr.mxu0 0.0
    %958 = vmatpush1.msra.mxu0 %v935
    %959 = vmatprep.subr.mxu0 0.0
    %960 = vmatpush1.msra.mxu0 %v934
    %961 = vmatprep.subr.mxu0 0.0
    %962 = vmatpush1.msra.mxu0 %v933
    %963 = vmatprep.subr.mxu0 0.0
    %964 = vmatpush1.msra.mxu0 %v932
    %965 = vmatprep.subr.mxu0 0.0
    %966 = vmatpush1.msra.mxu0 %v931
    %967 = vmatprep.subr.mxu0 0.0
    %968 = vmatpush1.msra.mxu0 %v930
    %969 = vmatprep.subr.mxu0 0.0
    %970 = vmatpush1.msra.mxu0 %v929
    %971 = vmatprep.subr.mxu0 0.0
    %972 = vmatpush1.msra.mxu0 %v928
    %973 = vmatprep.subr.mxu0 0.0
    %974 = vmatpush1.msra.mxu0 %v927
    %975 = vmatprep.subr.mxu0 0.0
    %976 = vmatpush1.msra.mxu0 %v926
    %977 = vmatprep.subr.mxu0 0.0
    %978 = vmatpush2.msra.mxu0 0.0
    %979 = vmatprep.subr.mxu0 0.0
    %980 = vmatpush2.msra.mxu0 0.0
    %981 = vmatprep.subr.mxu0 0.0
    %982 = vmatpush2.msra.mxu0 0.0
    %983 = vmatprep.subr.mxu0 0.0
    %984 = vmatpush2.msra.mxu0 0.0
    %985 = vmatprep.subr.mxu0 0.0
    %986 = vmatpush2.msra.mxu0 0.0
    %987 = vmatprep.subr.mxu0 0.0
    %988 = vmatpush2.msra.mxu0 0.0
    %989 = vmatprep.subr.mxu0 0.0
    %990 = vmatpush2.msra.mxu0 0.0
    %991 = vmatprep.subr.mxu0 0.0
    %992 = vmatpush2.msra.mxu0 0.0
    %993 = vmatprep.subr.mxu0 0.0
    %994 = vmatpush2.msra.mxu0 0.0
    %995 = vmatprep.subr.mxu0 0.0
    %996 = vmatpush2.msra.mxu0 0.0
    %997 = vmatprep.subr.mxu0 0.0
    %998 = vmatpush2.msra.mxu0 0.0
    %999 = vmatprep.subr.mxu0 0.0
    %1000 = vmatpush2.msra.mxu0 0.0
    %1001 = vmatprep.subr.mxu0 0.0
    %1002 = vmatpush2.msra.mxu0 0.0
    %1003 = vmatprep.subr.mxu0 0.0
    %1004 = vmatpush2.msra.mxu0 0.0
    %1005 = vmatprep.subr.mxu0 0.0
    %1006 = vmatpush2.msra.mxu0 0.0
    %1007 = vmatprep.subr.mxu0 0.0
    %1008 = vmatpush2.msra.mxu0 0.0
    %1009 = vmatprep.mubr.f32.mxu0 0.0
    %1010 = vmatmul.mubr.f32.gmra.mxu0 %v943
    %v1011 = vpop.f32.mrf.mxu0
    %v1012 = vadd.f32 0.0, %v1011
    %v1013 = vpop.f32.mrf.mxu0
    %1014 = vdwg.mxu0
    %v1015 = vadd.f32 %v944, %v1012
    %v1016 = vtanh.pop %v1015
    %v1017 = vld [vmem:[%s326] sm:$0xff]
    %1018 = vmatprep.subr.mxu0 0.0
    %1019 = vmatpush1.msra.mxu0 %v941
    %1020 = vmatprep.subr.mxu0 0.0
    %1021 = vmatpush1.msra.mxu0 %v940
    %1022 = vmatprep.subr.mxu0 0.0
    %1023 = vmatpush1.msra.mxu0 %v939
    %1024 = vmatprep.subr.mxu0 0.0
    %1025 = vmatpush1.msra.mxu0 %v938
    %1026 = vmatprep.subr.mxu0 0.0
    %1027 = vmatpush1.msra.mxu0 %v937
    %1028 = vmatprep.subr.mxu0 0.0
    %1029 = vmatpush1.msra.mxu0 %v936
    %1030 = vmatprep.subr.mxu0 0.0
    %1031 = vmatpush1.msra.mxu0 %v935
    %1032 = vmatprep.subr.mxu0 0.0
    %1033 = vmatpush1.msra.mxu0 %v934
    %1034 = vmatprep.subr.mxu0 0.0
    %1035 = vmatpush1.msra.mxu0 %v933
    %1036 = vmatprep.subr.mxu0 0.0
    %1037 = vmatpush1.msra.mxu0 %v932
    %1038 = vmatprep.subr.mxu0 0.0
    %1039 = vmatpush1.msra.mxu0 %v931
    %1040 = vmatprep.subr.mxu0 0.0
    %1041 = vmatpush1.msra.mxu0 %v930
    %1042 = vmatprep.subr.mxu0 0.0
    %1043 = vmatpush1.msra.mxu0 %v929
    %1044 = vmatprep.subr.mxu0 0.0
    %1045 = vmatpush1.msra.mxu0 %v928
    %1046 = vmatprep.subr.mxu0 0.0
    %1047 = vmatpush1.msra.mxu0 %v927
    %1048 = vmatprep.subr.mxu0 0.0
    %1049 = vmatpush1.msra.mxu0 %v926
    %1050 = vmatprep.subr.mxu0 0.0
    %1051 = vmatpush2.msra.mxu0 0.0
    %1052 = vmatprep.subr.mxu0 0.0
    %1053 = vmatpush2.msra.mxu0 0.0
    %1054 = vmatprep.subr.mxu0 0.0
    %1055 = vmatpush2.msra.mxu0 0.0
    %1056 = vmatprep.subr.mxu0 0.0
    %1057 = vmatpush2.msra.mxu0 0.0
    %1058 = vmatprep.subr.mxu0 0.0
    %1059 = vmatpush2.msra.mxu0 0.0
    %1060 = vmatprep.subr.mxu0 0.0
    %1061 = vmatpush2.msra.mxu0 0.0
    %1062 = vmatprep.subr.mxu0 0.0
    %1063 = vmatpush2.msra.mxu0 0.0
    %1064 = vmatprep.subr.mxu0 0.0
    %1065 = vmatpush2.msra.mxu0 0.0
    %1066 = vmatprep.subr.mxu0 0.0
    %1067 = vmatpush2.msra.mxu0 0.0
    %1068 = vmatprep.subr.mxu0 0.0
    %1069 = vmatpush2.msra.mxu0 0.0
    %1070 = vmatprep.subr.mxu0 0.0
    %1071 = vmatpush2.msra.mxu0 0.0
    %1072 = vmatprep.subr.mxu0 0.0
    %1073 = vmatpush2.msra.mxu0 0.0
    %1074 = vmatprep.subr.mxu0 0.0
    %1075 = vmatpush2.msra.mxu0 0.0
    %1076 = vmatprep.subr.mxu0 0.0
    %1077 = vmatpush2.msra.mxu0 0.0
    %1078 = vmatprep.subr.mxu0 0.0
    %1079 = vmatpush2.msra.mxu0 0.0
    %1080 = vmatprep.subr.mxu0 0.0
    %1081 = vmatpush2.msra.mxu0 0.0
    %1082 = vmatprep.mubr.f32.mxu0 0.0
    %1083 = vmatmul.mubr.f32.gmra.mxu0 %v1016
    %v1084 = vpop.f32.mrf.mxu0
    %v1085 = vadd.f32 0.0, %v1084
    %v1086 = vpop.f32.mrf.mxu0
    %1087 = vdwg.mxu0
    %v1088 = vadd.f32 %v1017, %v1085
    %v1089 = vtanh.pop %v1088
    %v1090 = vld [vmem:[%s402] sm:$0xff]
    %1091 = vmatprep.subr.mxu0 0.0
    %1092 = vmatpush1.msra.mxu0 %v941
    %1093 = vmatprep.subr.mxu0 0.0
    %1094 = vmatpush1.msra.mxu0 %v940
    %1095 = vmatprep.subr.mxu0 0.0
    %1096 = vmatpush1.msra.mxu0 %v939
    %1097 = vmatprep.subr.mxu0 0.0
    %1098 = vmatpush1.msra.mxu0 %v938
    %1099 = vmatprep.subr.mxu0 0.0
    %1100 = vmatpush1.msra.mxu0 %v937
    %1101 = vmatprep.subr.mxu0 0.0
    %1102 = vmatpush1.msra.mxu0 %v936
    %1103 = vmatprep.subr.mxu0 0.0
    %1104 = vmatpush1.msra.mxu0 %v935
    %1105 = vmatprep.subr.mxu0 0.0
    %1106 = vmatpush1.msra.mxu0 %v934
    %1107 = vmatprep.subr.mxu0 0.0
    %1108 = vmatpush1.msra.mxu0 %v933
    %1109 = vmatprep.subr.mxu0 0.0
    %1110 = vmatpush1.msra.mxu0 %v932
    %1111 = vmatprep.subr.mxu0 0.0
    %1112 = vmatpush1.msra.mxu0 %v931
    %1113 = vmatprep.subr.mxu0 0.0
    %1114 = vmatpush1.msra.mxu0 %v930
    %1115 = vmatprep.subr.mxu0 0.0
    %1116 = vmatpush1.msra.mxu0 %v929
    %1117 = vmatprep.subr.mxu0 0.0
    %1118 = vmatpush1.msra.mxu0 %v928
    %1119 = vmatprep.subr.mxu0 0.0
    %1120 = vmatpush1.msra.mxu0 %v927
    %1121 = vmatprep.subr.mxu0 0.0
    %1122 = vmatpush1.msra.mxu0 %v926
    %1123 = vmatprep.subr.mxu0 0.0
    %1124 = vmatpush2.msra.mxu0 0.0
    %1125 = vmatprep.subr.mxu0 0.0
    %1126 = vmatpush2.msra.mxu0 0.0
    %1127 = vmatprep.subr.mxu0 0.0
    %1128 = vmatpush2.msra.mxu0 0.0
    %1129 = vmatprep.subr.mxu0 0.0
    %1130 = vmatpush2.msra.mxu0 0.0
    %1131 = vmatprep.subr.mxu0 0.0
    %1132 = vmatpush2.msra.mxu0 0.0
    %1133 = vmatprep.subr.mxu0 0.0
    %1134 = vmatpush2.msra.mxu0 0.0
    %1135 = vmatprep.subr.mxu0 0.0
    %1136 = vmatpush2.msra.mxu0 0.0
    %1137 = vmatprep.subr.mxu0 0.0
    %1138 = vmatpush2.msra.mxu0 0.0
    %1139 = vmatprep.subr.mxu0 0.0
    %1140 = vmatpush2.msra.mxu0 0.0
    %1141 = vmatprep.subr.mxu0 0.0
    %1142 = vmatpush2.msra.mxu0 0.0
    %1143 = vmatprep.subr.mxu0 0.0
    %1144 = vmatpush2.msra.mxu0 0.0
    %1145 = vmatprep.subr.mxu0 0.0
    %1146 = vmatpush2.msra.mxu0 0.0
    %1147 = vmatprep.subr.mxu0 0.0
    %1148 = vmatpush2.msra.mxu0 0.0
    %1149 = vmatprep.subr.mxu0 0.0
    %1150 = vmatpush2.msra.mxu0 0.0
    %1151 = vmatprep.subr.mxu0 0.0
    %1152 = vmatpush2.msra.mxu0 0.0
    %1153 = vmatprep.subr.mxu0 0.0
    %1154 = vmatpush2.msra.mxu0 0.0
    %1155 = vmatprep.mubr.f32.mxu0 0.0
    %1156 = vmatmul.mubr.f32.gmra.mxu0 %v1089
    %v1157 = vpop.f32.mrf.mxu0
    %v1158 = vadd.f32 0.0, %v1157
    %v1159 = vpop.f32.mrf.mxu0
    %1160 = vdwg.mxu0
    %v1161 = vadd.f32 %v1090, %v1158
    %v1162 = vtanh.pop %v1161
    %v1163 = vld [vmem:[%s478] sm:$0xff]
    %1164 = vmatprep.subr.mxu0 0.0
    %1165 = vmatpush1.msra.mxu0 %v941
    %1166 = vmatprep.subr.mxu0 0.0
    %1167 = vmatpush1.msra.mxu0 %v940
    %1168 = vmatprep.subr.mxu0 0.0
    %1169 = vmatpush1.msra.mxu0 %v939
    %1170 = vmatprep.subr.mxu0 0.0
    %1171 = vmatpush1.msra.mxu0 %v938
    %1172 = vmatprep.subr.mxu0 0.0
    %1173 = vmatpush1.msra.mxu0 %v937
    %1174 = vmatprep.subr.mxu0 0.0
    %1175 = vmatpush1.msra.mxu0 %v936
    %1176 = vmatprep.subr.mxu0 0.0
    %1177 = vmatpush1.msra.mxu0 %v935
    %1178 = vmatprep.subr.mxu0 0.0
    %1179 = vmatpush1.msra.mxu0 %v934
    %1180 = vmatprep.subr.mxu0 0.0
    %1181 = vmatpush1.msra.mxu0 %v933
    %1182 = vmatprep.subr.mxu0 0.0
    %1183 = vmatpush1.msra.mxu0 %v932
    %1184 = vmatprep.subr.mxu0 0.0
    %1185 = vmatpush1.msra.mxu0 %v931
    %1186 = vmatprep.subr.mxu0 0.0
    %1187 = vmatpush1.msra.mxu0 %v930
    %1188 = vmatprep.subr.mxu0 0.0
    %1189 = vmatpush1.msra.mxu0 %v929
    %1190 = vmatprep.subr.mxu0 0.0
    %1191 = vmatpush1.msra.mxu0 %v928
    %1192 = vmatprep.subr.mxu0 0.0
    %1193 = vmatpush1.msra.mxu0 %v927
    %1194 = vmatprep.subr.mxu0 0.0
    %1195 = vmatpush1.msra.mxu0 %v926
    %1196 = vmatprep.subr.mxu0 0.0
    %1197 = vmatpush2.msra.mxu0 0.0
    %1198 = vmatprep.subr.mxu0 0.0
    %1199 = vmatpush2.msra.mxu0 0.0
    %1200 = vmatprep.subr.mxu0 0.0
    %1201 = vmatpush2.msra.mxu0 0.0
    %1202 = vmatprep.subr.mxu0 0.0
    %1203 = vmatpush2.msra.mxu0 0.0
    %1204 = vmatprep.subr.mxu0 0.0
    %1205 = vmatpush2.msra.mxu0 0.0
    %1206 = vmatprep.subr.mxu0 0.0
    %1207 = vmatpush2.msra.mxu0 0.0
    %1208 = vmatprep.subr.mxu0 0.0
    %1209 = vmatpush2.msra.mxu0 0.0
    %1210 = vmatprep.subr.mxu0 0.0
    %1211 = vmatpush2.msra.mxu0 0.0
    %1212 = vmatprep.subr.mxu0 0.0
    %1213 = vmatpush2.msra.mxu0 0.0
    %1214 = vmatprep.subr.mxu0 0.0
    %1215 = vmatpush2.msra.mxu0 0.0
    %1216 = vmatprep.subr.mxu0 0.0
    %1217 = vmatpush2.msra.mxu0 0.0
    %1218 = vmatprep.subr.mxu0 0.0
    %1219 = vmatpush2.msra.mxu0 0.0
    %1220 = vmatprep.subr.mxu0 0.0
    %1221 = vmatpush2.msra.mxu0 0.0
    %1222 = vmatprep.subr.mxu0 0.0
    %1223 = vmatpush2.msra.mxu0 0.0
    %1224 = vmatprep.subr.mxu0 0.0
    %1225 = vmatpush2.msra.mxu0 0.0
    %1226 = vmatprep.subr.mxu0 0.0
    %1227 = vmatpush2.msra.mxu0 0.0
    %1228 = vmatprep.mubr.f32.mxu0 0.0
    %1229 = vmatmul.mubr.f32.gmra.mxu0 %v1162
    %v1230 = vpop.f32.mrf.mxu0
    %v1231 = vadd.f32 0.0, %v1230
    %v1232 = vpop.f32.mrf.mxu0
    %1233 = vdwg.mxu0
    %v1234 = vadd.f32 %v1163, %v1231
    %v1235 = vtanh.pop %v1234
    %v1236 = vld [vmem:[%s554] sm:$0xff]
    %1237 = vmatprep.subr.mxu0 0.0
    %1238 = vmatpush1.msra.mxu0 %v941
    %1239 = vmatprep.subr.mxu0 0.0
    %1240 = vmatpush1.msra.mxu0 %v940
    %1241 = vmatprep.subr.mxu0 0.0
    %1242 = vmatpush1.msra.mxu0 %v939
    %1243 = vmatprep.subr.mxu0 0.0
    %1244 = vmatpush1.msra.mxu0 %v938
    %1245 = vmatprep.subr.mxu0 0.0
    %1246 = vmatpush1.msra.mxu0 %v937
    %1247 = vmatprep.subr.mxu0 0.0
    %1248 = vmatpush1.msra.mxu0 %v936
    %1249 = vmatprep.subr.mxu0 0.0
    %1250 = vmatpush1.msra.mxu0 %v935
    %1251 = vmatprep.subr.mxu0 0.0
    %1252 = vmatpush1.msra.mxu0 %v934
    %1253 = vmatprep.subr.mxu0 0.0
    %1254 = vmatpush1.msra.mxu0 %v933
    %1255 = vmatprep.subr.mxu0 0.0
    %1256 = vmatpush1.msra.mxu0 %v932
    %1257 = vmatprep.subr.mxu0 0.0
    %1258 = vmatpush1.msra.mxu0 %v931
    %1259 = vmatprep.subr.mxu0 0.0
    %1260 = vmatpush1.msra.mxu0 %v930
    %1261 = vmatprep.subr.mxu0 0.0
    %1262 = vmatpush1.msra.mxu0 %v929
    %1263 = vmatprep.subr.mxu0 0.0
    %1264 = vmatpush1.msra.mxu0 %v928
    %1265 = vmatprep.subr.mxu0 0.0
    %1266 = vmatpush1.msra.mxu0 %v927
    %1267 = vmatprep.subr.mxu0 0.0
    %1268 = vmatpush1.msra.mxu0 %v926
    %1269 = vmatprep.subr.mxu0 0.0
    %1270 = vmatpush2.msra.mxu0 0.0
    %1271 = vmatprep.subr.mxu0 0.0
    %1272 = vmatpush2.msra.mxu0 0.0
    %1273 = vmatprep.subr.mxu0 0.0
    %1274 = vmatpush2.msra.mxu0 0.0
    %1275 = vmatprep.subr.mxu0 0.0
    %1276 = vmatpush2.msra.mxu0 0.0
    %1277 = vmatprep.subr.mxu0 0.0
    %1278 = vmatpush2.msra.mxu0 0.0
    %1279 = vmatprep.subr.mxu0 0.0
    %1280 = vmatpush2.msra.mxu0 0.0
    %1281 = vmatprep.subr.mxu0 0.0
    %1282 = vmatpush2.msra.mxu0 0.0
    %1283 = vmatprep.subr.mxu0 0.0
    %1284 = vmatpush2.msra.mxu0 0.0
    %1285 = vmatprep.subr.mxu0 0.0
    %1286 = vmatpush2.msra.mxu0 0.0
    %1287 = vmatprep.subr.mxu0 0.0
    %1288 = vmatpush2.msra.mxu0 0.0
    %1289 = vmatprep.subr.mxu0 0.0
    %1290 = vmatpush2.msra.mxu0 0.0
    %1291 = vmatprep.subr.mxu0 0.0
    %1292 = vmatpush2.msra.mxu0 0.0
    %1293 = vmatprep.subr.mxu0 0.0
    %1294 = vmatpush2.msra.mxu0 0.0
    %1295 = vmatprep.subr.mxu0 0.0
    %1296 = vmatpush2.msra.mxu0 0.0
    %1297 = vmatprep.subr.mxu0 0.0
    %1298 = vmatpush2.msra.mxu0 0.0
    %1299 = vmatprep.subr.mxu0 0.0
    %1300 = vmatpush2.msra.mxu0 0.0
    %1301 = vmatprep.mubr.f32.mxu0 0.0
    %1302 = vmatmul.mubr.f32.gmra.mxu0 %v1235
    %v1303 = vpop.f32.mrf.mxu0
    %v1304 = vadd.f32 0.0, %v1303
    %v1305 = vpop.f32.mrf.mxu0
    %1306 = vdwg.mxu0
    %v1307 = vadd.f32 %v1236, %v1304
    %v1308 = vtanh.pop %v1307
    %v1309 = vld [vmem:[%s630] sm:$0xff]
    %1310 = vmatprep.subr.mxu0 0.0
    %1311 = vmatpush1.msra.mxu0 %v941
    %1312 = vmatprep.subr.mxu0 0.0
    %1313 = vmatpush1.msra.mxu0 %v940
    %1314 = vmatprep.subr.mxu0 0.0
    %1315 = vmatpush1.msra.mxu0 %v939
    %1316 = vmatprep.subr.mxu0 0.0
    %1317 = vmatpush1.msra.mxu0 %v938
    %1318 = vmatprep.subr.mxu0 0.0
    %1319 = vmatpush1.msra.mxu0 %v937
    %1320 = vmatprep.subr.mxu0 0.0
    %1321 = vmatpush1.msra.mxu0 %v936
    %1322 = vmatprep.subr.mxu0 0.0
    %1323 = vmatpush1.msra.mxu0 %v935
    %1324 = vmatprep.subr.mxu0 0.0
    %1325 = vmatpush1.msra.mxu0 %v934
    %1326 = vmatprep.subr.mxu0 0.0
    %1327 = vmatpush1.msra.mxu0 %v933
    %1328 = vmatprep.subr.mxu0 0.0
    %1329 = vmatpush1.msra.mxu0 %v932
    %1330 = vmatprep.subr.mxu0 0.0
    %1331 = vmatpush1.msra.mxu0 %v931
    %1332 = vmatprep.subr.mxu0 0.0
    %1333 = vmatpush1.msra.mxu0 %v930
    %1334 = vmatprep.subr.mxu0 0.0
    %1335 = vmatpush1.msra.mxu0 %v929
    %1336 = vmatprep.subr.mxu0 0.0
    %1337 = vmatpush1.msra.mxu0 %v928
    %1338 = vmatprep.subr.mxu0 0.0
    %1339 = vmatpush1.msra.mxu0 %v927
    %1340 = vmatprep.subr.mxu0 0.0
    %1341 = vmatpush1.msra.mxu0 %v926
    %1342 = vmatprep.subr.mxu0 0.0
    %1343 = vmatpush2.msra.mxu0 0.0
    %1344 = vmatprep.subr.mxu0 0.0
    %1345 = vmatpush2.msra.mxu0 0.0
    %1346 = vmatprep.subr.mxu0 0.0
    %1347 = vmatpush2.msra.mxu0 0.0
    %1348 = vmatprep.subr.mxu0 0.0
    %1349 = vmatpush2.msra.mxu0 0.0
    %1350 = vmatprep.subr.mxu0 0.0
    %1351 = vmatpush2.msra.mxu0 0.0
    %1352 = vmatprep.subr.mxu0 0.0
    %1353 = vmatpush2.msra.mxu0 0.0
    %1354 = vmatprep.subr.mxu0 0.0
    %1355 = vmatpush2.msra.mxu0 0.0
    %1356 = vmatprep.subr.mxu0 0.0
    %1357 = vmatpush2.msra.mxu0 0.0
    %1358 = vmatprep.subr.mxu0 0.0
    %1359 = vmatpush2.msra.mxu0 0.0
    %1360 = vmatprep.subr.mxu0 0.0
    %1361 = vmatpush2.msra.mxu0 0.0
    %1362 = vmatprep.subr.mxu0 0.0
    %1363 = vmatpush2.msra.mxu0 0.0
    %1364 = vmatprep.subr.mxu0 0.0
    %1365 = vmatpush2.msra.mxu0 0.0
    %1366 = vmatprep.subr.mxu0 0.0
    %1367 = vmatpush2.msra.mxu0 0.0
    %1368 = vmatprep.subr.mxu0 0.0
    %1369 = vmatpush2.msra.mxu0 0.0
    %1370 = vmatprep.subr.mxu0 0.0
    %1371 = vmatpush2.msra.mxu0 0.0
    %1372 = vmatprep.subr.mxu0 0.0
    %1373 = vmatpush2.msra.mxu0 0.0
    %1374 = vmatprep.mubr.f32.mxu0 0.0
    %1375 = vmatmul.mubr.f32.gmra.mxu0 %v1308
    %v1376 = vpop.f32.mrf.mxu0
    %v1377 = vadd.f32 0.0, %v1376
    %v1378 = vpop.f32.mrf.mxu0
    %1379 = vdwg.mxu0
    %v1380 = vadd.f32 %v1309, %v1377
    %v1381 = vtanh.pop %v1380
    %v1382 = vld [vmem:[%s706] sm:$0xff]
    %1383 = vmatprep.subr.mxu0 0.0
    %1384 = vmatpush1.msra.mxu0 %v941
    %1385 = vmatprep.subr.mxu0 0.0
    %1386 = vmatpush1.msra.mxu0 %v940
    %1387 = vmatprep.subr.mxu0 0.0
    %1388 = vmatpush1.msra.mxu0 %v939
    %1389 = vmatprep.subr.mxu0 0.0
    %1390 = vmatpush1.msra.mxu0 %v938
    %1391 = vmatprep.subr.mxu0 0.0
    %1392 = vmatpush1.msra.mxu0 %v937
    %1393 = vmatprep.subr.mxu0 0.0
    %1394 = vmatpush1.msra.mxu0 %v936
    %1395 = vmatprep.subr.mxu0 0.0
    %1396 = vmatpush1.msra.mxu0 %v935
    %1397 = vmatprep.subr.mxu0 0.0
    %1398 = vmatpush1.msra.mxu0 %v934
    %1399 = vmatprep.subr.mxu0 0.0
    %1400 = vmatpush1.msra.mxu0 %v933
    %1401 = vmatprep.subr.mxu0 0.0
    %1402 = vmatpush1.msra.mxu0 %v932
    %1403 = vmatprep.subr.mxu0 0.0
    %1404 = vmatpush1.msra.mxu0 %v931
    %1405 = vmatprep.subr.mxu0 0.0
    %1406 = vmatpush1.msra.mxu0 %v930
    %1407 = vmatprep.subr.mxu0 0.0
    %1408 = vmatpush1.msra.mxu0 %v929
    %1409 = vmatprep.subr.mxu0 0.0
    %1410 = vmatpush1.msra.mxu0 %v928
    %1411 = vmatprep.subr.mxu0 0.0
    %1412 = vmatpush1.msra.mxu0 %v927
    %1413 = vmatprep.subr.mxu0 0.0
    %1414 = vmatpush1.msra.mxu0 %v926
    %1415 = vmatprep.subr.mxu0 0.0
    %1416 = vmatpush2.msra.mxu0 0.0
    %1417 = vmatprep.subr.mxu0 0.0
    %1418 = vmatpush2.msra.mxu0 0.0
    %1419 = vmatprep.subr.mxu0 0.0
    %1420 = vmatpush2.msra.mxu0 0.0
    %1421 = vmatprep.subr.mxu0 0.0
    %1422 = vmatpush2.msra.mxu0 0.0
    %1423 = vmatprep.subr.mxu0 0.0
    %1424 = vmatpush2.msra.mxu0 0.0
    %1425 = vmatprep.subr.mxu0 0.0
    %1426 = vmatpush2.msra.mxu0 0.0
    %1427 = vmatprep.subr.mxu0 0.0
    %1428 = vmatpush2.msra.mxu0 0.0
    %1429 = vmatprep.subr.mxu0 0.0
    %1430 = vmatpush2.msra.mxu0 0.0
    %1431 = vmatprep.subr.mxu0 0.0
    %1432 = vmatpush2.msra.mxu0 0.0
    %1433 = vmatprep.subr.mxu0 0.0
    %1434 = vmatpush2.msra.mxu0 0.0
    %1435 = vmatprep.subr.mxu0 0.0
    %1436 = vmatpush2.msra.mxu0 0.0
    %1437 = vmatprep.subr.mxu0 0.0
    %1438 = vmatpush2.msra.mxu0 0.0
    %1439 = vmatprep.subr.mxu0 0.0
    %1440 = vmatpush2.msra.mxu0 0.0
    %1441 = vmatprep.subr.mxu0 0.0
    %1442 = vmatpush2.msra.mxu0 0.0
    %1443 = vmatprep.subr.mxu0 0.0
    %1444 = vmatpush2.msra.mxu0 0.0
    %1445 = vmatprep.subr.mxu0 0.0
    %1446 = vmatpush2.msra.mxu0 0.0
    %1447 = vmatprep.mubr.f32.mxu0 0.0
    %1448 = vmatmul.mubr.f32.gmra.mxu0 %v1381
    %v1449 = vpop.f32.mrf.mxu0
    %v1450 = vadd.f32 0.0, %v1449
    %v1451 = vpop.f32.mrf.mxu0
    %1452 = vdwg.mxu0
    %v1453 = vadd.f32 %v1382, %v1450
    %v1454 = vtanh.pop %v1453
    %v1455 = vld [vmem:[#allocation9] sm:$0xff]
    %v1456 = vld [vmem:[#allocation9 + $0x8] sm:$0xff]
    %v1457 = vld [vmem:[#allocation9 + $0x10] sm:$0xff]
    %v1458 = vld [vmem:[#allocation9 + $0x18] sm:$0xff]
    %v1459 = vld [vmem:[#allocation9 + $0x20] sm:$0xff]
    %v1460 = vld [vmem:[#allocation9 + $0x28] sm:$0xff]
    %v1461 = vld [vmem:[#allocation9 + $0x30] sm:$0xff]
    %v1462 = vld [vmem:[#allocation9 + $0x38] sm:$0xff]
    %v1463 = vld [vmem:[#allocation9 + $0x40] sm:$0xff]
    %v1464 = vld [vmem:[#allocation9 + $0x48] sm:$0xff]
    %v1465 = vld [vmem:[#allocation9 + $0x50] sm:$0xff]
    %v1466 = vld [vmem:[#allocation9 + $0x58] sm:$0xff]
    %v1467 = vld [vmem:[#allocation9 + $0x60] sm:$0xff]
    %v1468 = vld [vmem:[#allocation9 + $0x68] sm:$0xff]
    %v1469 = vld [vmem:[#allocation9 + $0x70] sm:$0xff]
    %v1470 = vld [vmem:[#allocation9 + $0x78] sm:$0xff]
    %v1471 = vld [vmem:[%s8] sm:$0x1]
    %v1473 = vlaneseq
    %v1474 = vshrl.u32 %v1473, 7
    %v1475 = vsub.s32 0, %v1474
    %v1476 = vrot.slane %v1471, %v1475
    %1478 = vmatprep.subr.mxu0 0.0
    %1479 = vmatpush1.msra.mxu0 %v1470
    %1480 = vmatprep.subr.mxu0 0.0
    %1481 = vmatpush1.msra.mxu0 %v1469
    %1482 = vmatprep.subr.mxu0 0.0
    %1483 = vmatpush1.msra.mxu0 %v1468
    %1484 = vmatprep.subr.mxu0 0.0
    %1485 = vmatpush1.msra.mxu0 %v1467
    %1486 = vmatprep.subr.mxu0 0.0
    %1487 = vmatpush1.msra.mxu0 %v1466
    %1488 = vmatprep.subr.mxu0 0.0
    %1489 = vmatpush1.msra.mxu0 %v1465
    %1490 = vmatprep.subr.mxu0 0.0
    %1491 = vmatpush1.msra.mxu0 %v1464
    %1492 = vmatprep.subr.mxu0 0.0
    %1493 = vmatpush1.msra.mxu0 %v1463
    %1494 = vmatprep.subr.mxu0 0.0
    %1495 = vmatpush1.msra.mxu0 %v1462
    %1496 = vmatprep.subr.mxu0 0.0
    %1497 = vmatpush1.msra.mxu0 %v1461
    %1498 = vmatprep.subr.mxu0 0.0
    %1499 = vmatpush1.msra.mxu0 %v1460
    %1500 = vmatprep.subr.mxu0 0.0
    %1501 = vmatpush1.msra.mxu0 %v1459
    %1502 = vmatprep.subr.mxu0 0.0
    %1503 = vmatpush1.msra.mxu0 %v1458
    %1504 = vmatprep.subr.mxu0 0.0
    %1505 = vmatpush1.msra.mxu0 %v1457
    %1506 = vmatprep.subr.mxu0 0.0
    %1507 = vmatpush1.msra.mxu0 %v1456
    %1508 = vmatprep.subr.mxu0 0.0
    %1509 = vmatpush1.msra.mxu0 %v1455
    %1510 = vmatprep.subr.mxu0 0.0
    %1511 = vmatpush2.msra.mxu0 0.0
    %1512 = vmatprep.subr.mxu0 0.0
    %1513 = vmatpush2.msra.mxu0 0.0
    %1514 = vmatprep.subr.mxu0 0.0
    %1515 = vmatpush2.msra.mxu0 0.0
    %1516 = vmatprep.subr.mxu0 0.0
    %1517 = vmatpush2.msra.mxu0 0.0
    %1518 = vmatprep.subr.mxu0 0.0
    %1519 = vmatpush2.msra.mxu0 0.0
    %1520 = vmatprep.subr.mxu0 0.0
    %1521 = vmatpush2.msra.mxu0 0.0
    %1522 = vmatprep.subr.mxu0 0.0
    %1523 = vmatpush2.msra.mxu0 0.0
    %1524 = vmatprep.subr.mxu0 0.0
    %1525 = vmatpush2.msra.mxu0 0.0
    %1526 = vmatprep.subr.mxu0 0.0
    %1527 = vmatpush2.msra.mxu0 0.0
    %1528 = vmatprep.subr.mxu0 0.0
    %1529 = vmatpush2.msra.mxu0 0.0
    %1530 = vmatprep.subr.mxu0 0.0
    %1531 = vmatpush2.msra.mxu0 0.0
    %1532 = vmatprep.subr.mxu0 0.0
    %1533 = vmatpush2.msra.mxu0 0.0
    %1534 = vmatprep.subr.mxu0 0.0
    %1535 = vmatpush2.msra.mxu0 0.0
    %1536 = vmatprep.subr.mxu0 0.0
    %1537 = vmatpush2.msra.mxu0 0.0
    %1538 = vmatprep.subr.mxu0 0.0
    %1539 = vmatpush2.msra.mxu0 0.0
    %1540 = vmatprep.subr.mxu0 0.0
    %1541 = vmatpush2.msra.mxu0 0.0
    %1542 = vmatprep.mubr.f32.mxu0 0.0
    %1543 = vmatmul.mubr.f32.gmra.mxu0 %v1454
    %v1544 = vpop.f32.mrf.mxu0
    %v1545 = vadd.f32 %v1476, %v1544
    %v1546 = vpop.f32.mrf.mxu0
    %1547 = vdwg.mxu0
    %1548 = vst [vmem:[%s9] sm:$0xff] %v1545
    // Predicated region
    $region54: #{rnn_model_forward.1} parent=1 // pred_check
      _
    $region55: #{rnn_model_forward.1} parent=1 // pred_check_branch
      %1550 = sbr.rel (0) target = $region57
    $region56: #{rnn_model_forward.1} parent=1 // pred_region
      _
    $region57: #{rnn_model_forward.1} parent=1 // pred_fallthru
      _
    // Predicated region
    $region58: #{rnn_model_forward.1} parent=1 // pred_check
      _
    $region59: #{rnn_model_forward.1} parent=1 // pred_check_branch
      %1552 = sbr.rel (0) target = $region61
    $region60: #{rnn_model_forward.1} parent=1 // pred_region
      _
    $region61: #{rnn_model_forward.1} parent=1 // pred_fallthru
      _
    %1553 = vsyncpa [#allocation5], 1
    %1554 = vsyncpa [#allocation7], 1
    %1555 = vsyncpa [#allocation10], 1

</llo_original>
